<compile_context>
chip_gen: v7x
topology: tpu7x:2x2x1
jax: 0.10.0
libtpu: 0.0.40
codegen_flags: <defaults>
</compile_context>

<pallas_src>
import functools
import math

import jax
import jax.numpy as jnp
from jax.experimental import pallas as pl
from jax.experimental.pallas import tpu as pltpu

NEG_BIG = -10000000000.0
DIST_THRESHOLD = 250.0


# ----------------------------- kernel --------------------------------------- #

def _attn_kernel(alpha, f1_ref, f2_ref, dist_ref, h_ref, hprime_ref, attn_ref):
    # logits: e[i, j] = h[i]·a1 + h[j]·a2, then LeakyReLU(alpha) -- all f32 VPU
    e = f1_ref[...] + f2_ref[...]                       # (TM, N) broadcast add
    if 0.0 <= alpha <= 1.0:
        e = jnp.maximum(e, alpha * e)                   # LeakyReLU, 2 VPU ops/elem
    else:
        e = jnp.where(e > 0, e, alpha * e)
    # adjacency mask fused into the kernel (exact f32 compare at 250.0)
    masked = jnp.where(dist_ref[...] <= DIST_THRESHOLD, e, jnp.float32(NEG_BIG))
    # row softmax (dim=1) in f32; rows with no neighbor fall back to uniform 1/N
    m = jnp.max(masked, axis=1, keepdims=True)
    p = jnp.exp(masked - m)
    s = jnp.sum(p, axis=1, keepdims=True)
    attn = p * pl.reciprocal(s, approx=True)
    if attn_ref.dtype == jnp.bfloat16:
        attn_b = attn.astype(jnp.bfloat16)              # single cast, reused as MXU LHS
        attn_ref[...] = attn_b
        lhs = attn_b
    else:
        attn_ref[...] = attn
        lhs = attn.astype(jnp.bfloat16)
    # h_prime = attn @ h on the MXU (bf16 operands, f32 accumulation)
    hprime_ref[...] = jnp.dot(lhs, h_ref[...], preferred_element_type=jnp.float32)


# ----------------------------- wrapper -------------------------------------- #

def _vmem_capacity_bytes():
    try:
        return int(pltpu.get_tpu_info().vmem_capacity_bytes)
    except Exception:
        return 64 << 20   # conservative: assume v7x-sized (64 MiB) VMEM


def _vmem_estimate_bytes(tm, n, f_pad, attn_bytes):
    streamed = (
        2 * tm * n * 4               # f32 distance tile (double-buffered)
        + 2 * tm * n * attn_bytes    # attention output tile
        + 2 * tm * f_pad * 4         # f32 h_prime tile
        + 2 * tm * 128 * 4           # (tm, 1) f1 tile, lane-padded
    )
    resident = (
        2 * n * f_pad * 2            # bf16 h (BlockSpec still double-buffers it)
        + 2 * 8 * n * 4              # (1, N) f2 row, sublane-padded
    )
    # in-kernel f32 temporaries the softmax materializes (masked, p, attn, bf16 copy)
    temporaries = 4 * tm * n * 4
    return streamed + resident + temporaries


def _pick_block_rows(n, f_pad, attn_bytes, budget):
    # cap tm so the row grid has >= 4 steps (pipelining + v7x dual-TC sharding)
    cap = max(8, n // 4)
    candidates = [tm for tm in (1024, 512, 256, 128, 64, 32, 16, 8)
                  if tm <= cap and n % tm == 0]
    for tm in candidates:
        if _vmem_estimate_bytes(tm, n, f_pad, attn_bytes) <= budget:
            return tm
    if candidates:
        # TODO(synk): flash-style column tiling when even an (8, N) strip is too big.
        return candidates[-1]
    return n


def gat_layer(x, distance, W, a, *, alpha, concat=False,
              attn_dtype=jnp.float32, block_rows=None):
    """x: (N, in_f) f32, distance: (N, N) f32, W: (in_f, F) f32, a: (2F, 1) f32."""
    N, _ = x.shape
    F = W.shape[1]

    # --- projection (tiny, ~1 MFLOP) left to plain XLA ---
    h = jnp.dot(x, W)                               # (N, F) f32
    f1 = jnp.dot(h, a[:F, :])                       # (N, 1) f32
    f2_row = jnp.dot(h, a[F:, :]).reshape(1, N)     # (1, N) f32

    # lane-dense feature width for h / h_prime (full MXU columns, unmasked stores)
    F_pad = max(128, ((F + 127) // 128) * 128)
    h_bf16 = jnp.pad(h.astype(jnp.bfloat16), ((0, 0), (0, F_pad - F)))

    distance = distance.astype(jnp.float32)
    attn_bytes = jnp.dtype(attn_dtype).itemsize

    cap = _vmem_capacity_bytes()
    budget = int(cap * 0.6)
    tm = block_rows if block_rows is not None else _pick_block_rows(
        N, F_pad, attn_bytes, budget)
    assert N % tm == 0, "block_rows must divide N"
    grid = (N // tm,)
    vmem_limit = int(min(cap, max(32 << 20,
                                  _vmem_estimate_bytes(tm, N, F_pad, attn_bytes)
                                  + (8 << 20))))

    h_prime_pad, attn = pl.pallas_call(
        functools.partial(_attn_kernel, float(alpha)),
        out_shape=(
            jax.ShapeDtypeStruct((N, F_pad), jnp.float32),
            jax.ShapeDtypeStruct((N, N), attn_dtype),
        ),
        grid=grid,
        in_specs=[
            pl.BlockSpec((tm, 1), lambda i: (i, 0)),      # f1 row tile (streamed)
            pl.BlockSpec((1, N), lambda i: (0, 0)),       # f2 row (resident)
            pl.BlockSpec((tm, N), lambda i: (i, 0)),      # f32 distance tile (streamed)
            pl.BlockSpec((N, F_pad), lambda i: (0, 0)),   # bf16 h (resident)
        ],
        out_specs=(
            pl.BlockSpec((tm, F_pad), lambda i: (i, 0)),  # h_prime tile (lane dense)
            pl.BlockSpec((tm, N), lambda i: (i, 0)),      # attention tile
        ),
        compiler_params=pltpu.CompilerParams(
            dimension_semantics=("parallel",),
            vmem_limit_bytes=vmem_limit,
        ),
    )(f1, f2_row, distance, h_bf16)

    h_prime = h_prime_pad[:, :F]
    # TODO(synk): F.dropout on attention in training mode is identity here.
    if concat:
        h_prime = jax.nn.elu(h_prime)
    return h_prime, attn


# ----------------------------- test harness --------------------------------- #

def _xavier_uniform(key, shape, gain):
    fan_in, fan_out = shape
    bound = gain * math.sqrt(6.0 / (fan_in + fan_out))
    return jax.random.uniform(key, shape, jnp.float32, -bound, bound)


def _reference(x, distance, W, a, alpha):
    # Algebraically identical to the PyTorch concat([h_i, h_j]) @ a construction:
    #   e[i, j] = h[i] · a[:F] + h[j] · a[F:]
    h = x @ W
    F = h.shape[1]
    e = h @ a[:F] + (h @ a[F:]).T
    e = jnp.where(e > 0, e, alpha * e)
    att = jnp.where(distance <= DIST_THRESHOLD, e, NEG_BIG * jnp.ones_like(e))
    att = jax.nn.softmax(att, axis=1)
    return att @ h, att


if __name__ == "__main__":
    key = jax.random.PRNGKey(0)
    k_x, k_d, k_w, k_a = jax.random.split(key, 4)

    N = 512             # number of nodes -> 4 row tiles in the grid (tm capped at N//4)
    in_features = 32
    out_features = 64
    alpha = 0.2         # LeakyReLU negative slope
    gain = 1.414

    x = jax.random.normal(k_x, (N, in_features), jnp.float32)
    distance = jax.random.uniform(k_d, (N, N), jnp.float32, 0.0, 500.0)
    W = _xavier_uniform(k_w, (in_features, out_features), gain)
    a = _xavier_uniform(k_a, (2 * out_features, 1), gain)

    h_prime, attn = gat_layer(x, distance, W, a, alpha=alpha)
    jax.block_until_ready((h_prime, attn))

    # correctness check against pure-JAX reference of the PyTorch math
    hp_ref, attn_ref = _reference(x, distance, W, a, alpha)
    # attention: f32 logits + f32 softmax, approx EUP reciprocal -> ~1e-3 level
    assert jnp.allclose(attn, attn_ref, atol=5e-3, rtol=5e-3), (
        float(jnp.max(jnp.abs(attn - attn_ref))))
    # h_prime: attn @ h runs with bf16 MXU operands (f32 accumulation)
    assert jnp.allclose(h_prime, hp_ref, atol=5e-2, rtol=5e-2), (
        float(jnp.max(jnp.abs(h_prime - hp_ref))))

    print("KERNEL_OK")
</pallas_src>

<mosaic_0001>
module attributes {stable_mosaic.version = 11 : i64} {
  func.func @_attn_kernel(%arg0: i32, %arg1: memref<128x1xf32, #tpu.memory_space<vmem>>, %arg2: memref<1x512xf32, #tpu.memory_space<vmem>>, %arg3: memref<128x512xf32, #tpu.memory_space<vmem>>, %arg4: memref<512x128xbf16, #tpu.memory_space<vmem>>, %arg5: memref<128x128xf32, #tpu.memory_space<vmem>>, %arg6: memref<128x512xf32, #tpu.memory_space<vmem>>) attributes {dimension_semantics = [#tpu.dimension_semantics<parallel>], iteration_bounds = array<i64: 4>, scalar_prefetch = 0 : i64, scratch_operands = 0 : i64, tpu.core_type = #tpu.core_type<tc>, window_params = [{transform_indices = @transform_0, window_bounds = array<i64: 128, 1>}, {pipeline_mode = #tpu.pipeline_mode<synchronous>, transform_indices = @transform_1, window_bounds = array<i64: 1, 512>}, {transform_indices = @transform_2, window_bounds = array<i64: 128, 512>}, {pipeline_mode = #tpu.pipeline_mode<synchronous>, transform_indices = @transform_3, window_bounds = array<i64: 512, 128>}, {transform_indices = @transform_4, window_bounds = array<i64: 128, 128>}, {transform_indices = @transform_5, window_bounds = array<i64: 128, 512>}]} {
    %c0 = arith.constant 0 : index
    %c0_0 = arith.constant 0 : index
    %0 = vector.load %arg1[%c0, %c0_0] : memref<128x1xf32, #tpu.memory_space<vmem>>, vector<128x1xf32>
    %c0_1 = arith.constant 0 : index
    %c0_2 = arith.constant 0 : index
    %1 = vector.load %arg2[%c0_1, %c0_2] : memref<1x512xf32, #tpu.memory_space<vmem>>, vector<1x512xf32>
    %2 = vector.broadcast %0 : vector<128x1xf32> to vector<128x512xf32>
    %3 = vector.broadcast %1 : vector<1x512xf32> to vector<128x512xf32>
    %4 = arith.addf %2, %3 : vector<128x512xf32>
    %cst = arith.constant 2.000000e-01 : f32
    %5 = vector.broadcast %cst : f32 to vector<128x512xf32>
    %6 = arith.mulf %5, %4 : vector<128x512xf32>
    %7 = arith.maximumf %4, %6 : vector<128x512xf32>
    %c0_3 = arith.constant 0 : index
    %c0_4 = arith.constant 0 : index
    %8 = vector.load %arg3[%c0_3, %c0_4] : memref<128x512xf32, #tpu.memory_space<vmem>>, vector<128x512xf32>
    %cst_5 = arith.constant 2.500000e+02 : f32
    %9 = vector.broadcast %cst_5 : f32 to vector<128x512xf32>
    %10 = arith.cmpf ole, %8, %9 : vector<128x512xf32>
    %cst_6 = arith.constant -1.000000e+10 : f32
    %11 = vector.broadcast %cst_6 : f32 to vector<128x512xf32>
    %12 = arith.select %10, %7, %11 : vector<128x512xi1>, vector<128x512xf32>
    %cst_7 = arith.constant dense<0xFF800000> : vector<128xf32>
    %13 = vector.multi_reduction <maximumf>, %12, %cst_7 [1] : vector<128x512xf32> to vector<128xf32>
    %14 = vector.shape_cast %13 : vector<128xf32> to vector<128x1xf32>
    %15 = vector.broadcast %14 : vector<128x1xf32> to vector<128x512xf32>
    %16 = arith.subf %12, %15 : vector<128x512xf32>
    %17 = math.exp %16 : vector<128x512xf32>
    %cst_8 = arith.constant dense<0.000000e+00> : vector<128xf32>
    %18 = vector.multi_reduction <add>, %17, %cst_8 [1] : vector<128x512xf32> to vector<128xf32>
    %19 = vector.shape_cast %18 : vector<128xf32> to vector<128x1xf32>
    %20 = tpu.reciprocal %19 {approx = true} : vector<128x1xf32> -> vector<128x1xf32>
    %21 = vector.broadcast %20 : vector<128x1xf32> to vector<128x512xf32>
    %22 = arith.mulf %17, %21 : vector<128x512xf32>
    %c0_9 = arith.constant 0 : index
    %c0_10 = arith.constant 0 : index
    %23 = vector.load %arg6[%c0_9, %c0_10] : memref<128x512xf32, #tpu.memory_space<vmem>>, vector<128x512xf32>
    tpu.vector_store %arg6[%c0_9, %c0_10], %22 {strides = array<i32>} : memref<128x512xf32, #tpu.memory_space<vmem>>, vector<128x512xf32>,
    %24 = arith.truncf %22 : vector<128x512xf32> to vector<128x512xbf16>
    %c0_11 = arith.constant 0 : index
    %c0_12 = arith.constant 0 : index
    %25 = vector.load %arg4[%c0_11, %c0_12] : memref<512x128xbf16, #tpu.memory_space<vmem>>, vector<512x128xbf16>
    %cst_13 = arith.constant dense<0.000000e+00> : vector<128x128xf32>
    %26 = tpu.matmul %24, %25, %cst_13 {dimension_numbers = #tpu.dot_dimension_numbers<[1], [0], [0], [1], [0, 0, 1, 1], [], []>} : vector<128x512xbf16>, vector<512x128xbf16>, vector<128x128xf32> -> vector<128x128xf32>
    %c0_14 = arith.constant 0 : index
    %c0_15 = arith.constant 0 : index
    %27 = vector.load %arg5[%c0_14, %c0_15] : memref<128x128xf32, #tpu.memory_space<vmem>>, vector<128x128xf32>
    tpu.vector_store %arg5[%c0_14, %c0_15], %26 {strides = array<i32>} : memref<128x128xf32, #tpu.memory_space<vmem>>, vector<128x128xf32>,
    return
  }
  func.func @transform_0(%arg0: i32) -> (i32, i32) {
    %c0_i32 = arith.constant 0 : i32
    %c0_i32_0 = arith.constant 0 : i32
    return %arg0, %c0_i32 : i32, i32
  }
  func.func @transform_1(%arg0: i32) -> (i32, i32) {
    %c0_i32 = arith.constant 0 : i32
    %c0_i32_0 = arith.constant 0 : i32
    %c0_i32_1 = arith.constant 0 : i32
    return %c0_i32, %c0_i32_0 : i32, i32
  }
  func.func @transform_2(%arg0: i32) -> (i32, i32) {
    %c0_i32 = arith.constant 0 : i32
    %c0_i32_0 = arith.constant 0 : i32
    return %arg0, %c0_i32 : i32, i32
  }
  func.func @transform_3(%arg0: i32) -> (i32, i32) {
    %c0_i32 = arith.constant 0 : i32
    %c0_i32_0 = arith.constant 0 : i32
    %c0_i32_1 = arith.constant 0 : i32
    return %c0_i32, %c0_i32_0 : i32, i32
  }
  func.func @transform_4(%arg0: i32) -> (i32, i32) {
    %c0_i32 = arith.constant 0 : i32
    %c0_i32_0 = arith.constant 0 : i32
    return %arg0, %c0_i32 : i32, i32
  }
  func.func @transform_5(%arg0: i32) -> (i32, i32) {
    %c0_i32 = arith.constant 0 : i32
    %c0_i32_0 = arith.constant 0 : i32
    return %arg0, %c0_i32 : i32, i32
  }
}

</mosaic_0001>

<llo_original>
// kernel: tpu_custom_call.1
$region0: #{tpu_custom_call.1}
  #allocation0 [shape = 'u32[]', space=smem, size = 0x4, offset = 0x4, fixed_abs, tag = 'smem constant byte address 0x4 - core index']
  #allocation1 [shape = 'u32[144,128]{1,0:T(1,128)}', space=vmem, size = 0x12000, scoped, tag = 'internal scratch']
  %s0 = inlined_call_operand.vmem [shape: f32[512,1], index: 0, kind: input, shape index: {}]
  %s1 = inlined_call_operand.vmem [shape: f32[1,512], index: 1, kind: input, shape index: {}]
  %s2 = inlined_call_operand.hbm [shape: f32[512,512], index: 2, kind: input, shape index: {}]
  %s3 = inlined_call_operand.vmem [shape: bf16[512,128], index: 3, kind: input, shape index: {}]
  %s4 = inlined_call_operand.hbm [shape: f32[512,128], index: 4, kind: output, shape index: {0}]
  %s5 = inlined_call_operand.hbm [shape: f32[512,512], index: 5, kind: output, shape index: {1}]
  %6 = xla_tuple %s4, %s5
  %s7 = sld [smem:[#allocation0]]
  $region61: #{tpu_custom_call.1} parent=0
    _
  %s9 = ssub.s32 1, %s7
  %s10 = scalar_select 0, %s9, %s7
  $region1: #{tpu_custom_call.1} parent=0
    #allocation2 [shape = 'u8[524288]{0}', space=vmem, size = 0x80000, scoped, tag = 'input window, operand 2']
    #allocation3 [shape = 's32[2]{0}', space=sflag, size = 0x8, scoped, tag = 'scoped memory for tpu_custom_call.1']
    #allocation4 [shape = 's32[2]{0}', space=sflag, size = 0x8, scoped, tag = 'scoped memory for tpu_custom_call.1']
    #allocation5 [shape = 'u8[131072]{0}', space=vmem, size = 0x20000, scoped, tag = 'output window, operand 0']
    #allocation6 [shape = 'u8[524288]{0}', space=vmem, size = 0x80000, scoped, tag = 'output window, operand 1']
    #allocation7 [shape = 's32[2]{0}', space=sflag, size = 0x8, scoped, tag = 'scoped memory for tpu_custom_call.1']
    %11 = vsyncpa [#allocation3], 0
    %s12 = scalar_lea.sflag [#allocation3], 1
    %13 = vsyncpa %s12, 0
    %14 = vsyncpa [#allocation4], 0
    %s15 = scalar_lea.sflag [#allocation4], 1
    %16 = vsyncpa %s15, 0
    %17 = vsyncpa [#allocation7], 0
    %s18 = scalar_lea.sflag [#allocation7], 1
    %19 = vsyncpa %s18, 0
    loop: start=0, step=1, limit=6
    $region2: #{tpu_custom_call.1} parent=1 // loop_pre_header
      _
    $region3: #{tpu_custom_call.1} parent=1 // loop_header
      %s21 = sphi 0, %s25
      %p22 = scmp.ge.s32.totalorder %s21, 6
      %s31 = sphi 0, %s33
      %s34 = sphi 0, %s31
      %s35 = sphi 0, %s34
      %s51 = sphi 0, %s35
      %s55 = sphi 0, %s55
      %s57 = sphi 0, %s55
      %s58 = sphi 0, %s57
      %s72 = sphi 0, %s58
      %s78 = sphi 0, %s80
      %s81 = sphi 0, %s78
      %s82 = sphi 0, %s81
      %s98 = sphi 0, %s82
      %s102 = sphi 0, %s102
      %s104 = sphi 0, %s102
      %s105 = sphi 0, %s104
      %s119 = sphi 0, %s105
      %s125 = sphi 0, %s127
      %s128 = sphi 0, %s125
      %s129 = sphi 0, %s128
      %s145 = sphi 0, %s129
      %s151 = sphi 0, %s153
      %s154 = sphi 0, %s151
      %s155 = sphi 0, %s154
      %s171 = sphi 0, %s155
    $region4: #{tpu_custom_call.1} parent=1 // loop_header_branch
      %24 = sbr.rel (%p22) target = $region8
    $region5: #{tpu_custom_call.1} parent=1 // loop_body
      %s26 = ssub.s32 %s21, 1
      %s27 = ssub.s32 %s21, 2
      %s28 = sadd.s32 %s21, 1
      %s29 = ssub.s32 %s21, %s28
      %p30 = scmp.eq.s32.totalorder %s29, 0
      %s32 = sadd.s32 %s31, 1
      %s33 = scalar_select %p30, %s31, %s32
      %p36 = pneg %p30
      %p37 = scmp.eq.s32.totalorder %s21, 3
      %p38 = por %p36, %p37
      %p39 = scmp.ne.s32.totalorder %s31, %s34
      %p40 = scmp.eq.s32.totalorder %s21, 0
      %p41 = por %p39, %p40
      %p42 = scmp.ne.s32.totalorder %s31, %s34
      %p43 = scmp.eq.s32.totalorder %s26, 3
      %p44 = por %p42, %p43
      %p45 = scmp.ne.s32.totalorder %s34, %s35
      %p46 = scmp.eq.s32.totalorder %s26, 0
      %p47 = por %p45, %p46
      %p48 = scmp.ne.s32.totalorder %s34, %s35
      %p49 = scmp.eq.s32.totalorder %s27, 3
      %p50 = por %p48, %p49
      %p52 = scmp.ne.s32.totalorder %s35, %s51
      %p53 = scmp.eq.s32.totalorder %s27, 0
      %p54 = por %p52, %p53
      %s56 = sadd.s32 %s55, 1
      %p59 = scmp.eq.s32.totalorder %s21, 3
      %p60 = scmp.ne.s32.totalorder %s55, %s57
      %p61 = scmp.eq.s32.totalorder %s21, 0
      %p62 = por %p60, %p61
      %p63 = scmp.ne.s32.totalorder %s55, %s57
      %p64 = scmp.eq.s32.totalorder %s26, 3
      %p65 = por %p63, %p64
      %p66 = scmp.ne.s32.totalorder %s57, %s58
      %p67 = scmp.eq.s32.totalorder %s26, 0
      %p68 = por %p66, %p67
      %p69 = scmp.ne.s32.totalorder %s57, %s58
      %p70 = scmp.eq.s32.totalorder %s27, 3
      %p71 = por %p69, %p70
      %p73 = scmp.ne.s32.totalorder %s58, %s72
      %p74 = scmp.eq.s32.totalorder %s27, 0
      %p75 = por %p73, %p74
      %s76 = ssub.s32 %s21, %s28
      %p77 = scmp.eq.s32.totalorder %s76, 0
      %s79 = sadd.s32 %s78, 1
      %s80 = scalar_select %p77, %s78, %s79
      %p83 = pneg %p77
      %p84 = scmp.eq.s32.totalorder %s21, 3
      %p85 = por %p83, %p84
      %p86 = scmp.ne.s32.totalorder %s78, %s81
      %p87 = scmp.eq.s32.totalorder %s21, 0
      %p88 = por %p86, %p87
      %p89 = scmp.ne.s32.totalorder %s78, %s81
      %p90 = scmp.eq.s32.totalorder %s26, 3
      %p91 = por %p89, %p90
      %p92 = scmp.ne.s32.totalorder %s81, %s82
      %p93 = scmp.eq.s32.totalorder %s26, 0
      %p94 = por %p92, %p93
      %p95 = scmp.ne.s32.totalorder %s81, %s82
      %p96 = scmp.eq.s32.totalorder %s27, 3
      %p97 = por %p95, %p96
      %p99 = scmp.ne.s32.totalorder %s82, %s98
      %p100 = scmp.eq.s32.totalorder %s27, 0
      %p101 = por %p99, %p100
      %s103 = sadd.s32 %s102, 1
      %p106 = scmp.eq.s32.totalorder %s21, 3
      %p107 = scmp.ne.s32.totalorder %s102, %s104
      %p108 = scmp.eq.s32.totalorder %s21, 0
      %p109 = por %p107, %p108
      %p110 = scmp.ne.s32.totalorder %s102, %s104
      %p111 = scmp.eq.s32.totalorder %s26, 3
      %p112 = por %p110, %p111
      %p113 = scmp.ne.s32.totalorder %s104, %s105
      %p114 = scmp.eq.s32.totalorder %s26, 0
      %p115 = por %p113, %p114
      %p116 = scmp.ne.s32.totalorder %s104, %s105
      %p117 = scmp.eq.s32.totalorder %s27, 3
      %p118 = por %p116, %p117
      %p120 = scmp.ne.s32.totalorder %s105, %s119
      %p121 = scmp.eq.s32.totalorder %s27, 0
      %p122 = por %p120, %p121
      %s123 = ssub.s32 %s21, %s28
      %p124 = scmp.eq.s32.totalorder %s123, 0
      %s126 = sadd.s32 %s125, 1
      %s127 = scalar_select %p124, %s125, %s126
      %p130 = pneg %p124
      %p131 = scmp.eq.s32.totalorder %s21, 3
      %p132 = por %p130, %p131
      %p133 = scmp.ne.s32.totalorder %s125, %s128
      %p134 = scmp.eq.s32.totalorder %s21, 0
      %p135 = por %p133, %p134
      %p136 = scmp.ne.s32.totalorder %s125, %s128
      %p137 = scmp.eq.s32.totalorder %s26, 3
      %p138 = por %p136, %p137
      %p139 = scmp.ne.s32.totalorder %s128, %s129
      %p140 = scmp.eq.s32.totalorder %s26, 0
      %p141 = por %p139, %p140
      %p142 = scmp.ne.s32.totalorder %s128, %s129
      %p143 = scmp.eq.s32.totalorder %s27, 3
      %p144 = por %p142, %p143
      %p146 = scmp.ne.s32.totalorder %s129, %s145
      %p147 = scmp.eq.s32.totalorder %s27, 0
      %p148 = por %p146, %p147
      %s149 = ssub.s32 %s21, %s28
      %p150 = scmp.eq.s32.totalorder %s149, 0
      %s152 = sadd.s32 %s151, 1
      %s153 = scalar_select %p150, %s151, %s152
      %p156 = pneg %p150
      %p157 = scmp.eq.s32.totalorder %s21, 3
      %p158 = por %p156, %p157
      %p159 = scmp.ne.s32.totalorder %s151, %s154
      %p160 = scmp.eq.s32.totalorder %s21, 0
      %p161 = por %p159, %p160
      %p162 = scmp.ne.s32.totalorder %s151, %s154
      %p163 = scmp.eq.s32.totalorder %s26, 3
      %p164 = por %p162, %p163
      %p165 = scmp.ne.s32.totalorder %s154, %s155
      %p166 = scmp.eq.s32.totalorder %s26, 0
      %p167 = por %p165, %p166
      %p168 = scmp.ne.s32.totalorder %s154, %s155
      %p169 = scmp.eq.s32.totalorder %s27, 3
      %p170 = por %p168, %p169
      %p172 = scmp.ne.s32.totalorder %s155, %s171
      %p173 = scmp.eq.s32.totalorder %s27, 0
      %p174 = por %p172, %p173
      %p175 = scmp.le.s32.totalorder 1, %s21
      %p176 = scmp.lt.s32.totalorder %s21, 5
      %p177 = pnand %p175, %p176
      %p178 = pneg %p177
      // Predicated region
      $region9: #{tpu_custom_call.1} parent=5 // pred_check
        _
      $region10: #{tpu_custom_call.1} parent=5 // pred_check_branch
        %180 = sbr.rel (%p177) target = $region12
      $region11: #{tpu_custom_call.1} parent=5 // pred_region
        %s181 = ssub.s32 %s21, 1
        // Predicated region
        $region13: #{tpu_custom_call.1} parent=11 // pred_check
          %p182 = pneg %p68
        $region14: #{tpu_custom_call.1} parent=11 // pred_check_branch
          %184 = sbr.rel (%p182) target = $region16
        $region15: #{tpu_custom_call.1} parent=11 // pred_region
          _
        $region16: #{tpu_custom_call.1} parent=11 // pred_fallthru
          _
        // Predicated region
        $region17: #{tpu_custom_call.1} parent=11 // pred_check
          %p185 = pneg %p115
        $region18: #{tpu_custom_call.1} parent=11 // pred_check_branch
          %187 = sbr.rel (%p185) target = $region20
        $region19: #{tpu_custom_call.1} parent=11 // pred_region
          _
        $region20: #{tpu_custom_call.1} parent=11 // pred_fallthru
          _
      $region12: #{tpu_custom_call.1} parent=5 // pred_fallthru
        _
      %p188 = scmp.lt.s32.totalorder %s21, 4
      // Predicated region
      $region21: #{tpu_custom_call.1} parent=5 // pred_check
        %p189 = pneg %p188
      $region22: #{tpu_custom_call.1} parent=5 // pred_check_branch
        %191 = sbr.rel (%p189) target = $region24
      $region23: #{tpu_custom_call.1} parent=5 // pred_region
        // Predicated region
        $region25: #{tpu_custom_call.1} parent=23 // pred_check
          %p192 = pneg %p41
        $region26: #{tpu_custom_call.1} parent=23 // pred_check_branch
          %194 = sbr.rel (%p192) target = $region28
        $region27: #{tpu_custom_call.1} parent=23 // pred_region
          %s195 = smul.u32 16, %s21
          %p196 = scmp.lt.s32.totalorder %s195, 63
          %s197 = scalar_select %p196, %s195, 63
          %s198 = smul.addr %s197, 8
          %s199 = scalar_lea.vmem %s0, %s198
          %s200 = smul.u32 16, %s21
        $region28: #{tpu_custom_call.1} parent=23 // pred_fallthru
          _
        // Predicated region
        $region29: #{tpu_custom_call.1} parent=23 // pred_check
          %p201 = pneg %p88
        $region30: #{tpu_custom_call.1} parent=23 // pred_check_branch
          %203 = sbr.rel (%p201) target = $region32
        $region31: #{tpu_custom_call.1} parent=23 // pred_region
          %s204 = sand.u32 %s78, 1
          %s205 = scalar_lea.sflag [#allocation3], %s204
          %s206 = sand.u32 %s78, 1
          %s207 = smul.addr %s206, 512
          %s208 = scalar_lea.vmem [#allocation2], %s207
          %s209 = smul.u32 16, %s21
          %s211 = ssub.s32 8192, 8192
          %212 = vsyncadd %s205, %s211
          %s213 = smul.addr %s209, 4
          %s214 = smul.addr %s213, 128
          %s215 = scalar_lea.hbm %s2, %s214
          %s216 = sshll.u32 %s208, 4
          %s217 = int_to_ptr.vmem [resolvable:$true] %s216
          %222 = dma.hbm_to_vmem [thread:$0]  %s215, 8192, %s217, %s205, 512, 512, 32
        $region32: #{tpu_custom_call.1} parent=23 // pred_fallthru
          _
      $region24: #{tpu_custom_call.1} parent=5 // pred_fallthru
        _
      %p223 = scmp.le.s32.totalorder 1, %s21
      %p224 = scmp.lt.s32.totalorder %s21, 5
      %p225 = pnand %p223, %p224
      %p226 = pneg %p225
      // Predicated region
      $region33: #{tpu_custom_call.1} parent=5 // pred_check
        _
      $region34: #{tpu_custom_call.1} parent=5 // pred_check_branch
        %228 = sbr.rel (%p225) target = $region36
      $region35: #{tpu_custom_call.1} parent=5 // pred_region
        %s229 = ssub.s32 %s21, 1
        %s230 = sand.u32 %s81, 1
        %s231 = scalar_lea.sflag [#allocation3], %s230
        %s232 = sand.u32 %s81, 1
        %s233 = smul.addr %s232, 512
        %s234 = scalar_lea.vmem [#allocation2], %s233
        // Predicated region
        $region37: #{tpu_custom_call.1} parent=35 // pred_check
          %p235 = pneg %p94
        $region38: #{tpu_custom_call.1} parent=35 // pred_check_branch
          %237 = sbr.rel (%p235) target = $region40
        $region39: #{tpu_custom_call.1} parent=35 // pred_region
          %238 = dma.done %s231, 8192
        $region40: #{tpu_custom_call.1} parent=35 // pred_fallthru
          _
        %s239 = smul.u32 16, %s26
        %p240 = scmp.lt.s32.totalorder %s239, 63
        %s241 = scalar_select %p240, %s239, 63
        %s242 = smul.addr %s241, 8
        %s243 = scalar_lea.vmem %s0, %s242
        %p244 = pneg %p47
        %p245 = pneg %p44
        %p246 = pneg %p68
        %p247 = pneg %p65
        %s248 = sand.u32 %s81, 1
        %s249 = scalar_lea.sflag [#allocation3], %s248
        %s250 = sand.u32 %s81, 1
        %s251 = smul.addr %s250, 512
        %s252 = scalar_lea.vmem [#allocation2], %s251
        %p253 = pneg %p94
        %p254 = pneg %p91
        %p255 = pneg %p115
        %p256 = pneg %p112
        %p257 = pneg %p141
        %p258 = pneg %p138
        %s259 = sand.u32 %s128, 1
        %s260 = scalar_lea.sflag [#allocation4], %s259
        %s261 = sand.u32 %s128, 1
        %s262 = smul.addr %s261, 128
        %s263 = scalar_lea.vmem [#allocation5], %s262
        %p264 = pneg %p167
        %p265 = pneg %p164
        %s266 = sand.u32 %s154, 1
        %s267 = scalar_lea.sflag [#allocation7], %s266
        %s268 = sand.u32 %s154, 1
        %s269 = smul.addr %s268, 512
        %s270 = scalar_lea.vmem [#allocation6], %s269
        %s271 = smul.u32 16, %s26
        %p272 = scmp.lt.s32.totalorder %s271, 63
        %s273 = scalar_select %p272, %s271, 63
        %s274 = smul.addr %s273, 8
        %s275 = scalar_lea.vmem %s0, %s274
        %s276 = smul.u32 16, %s26
        %s277 = smul.u32 16, %s26
        %s278 = smul.u32 16, %s26
        %s279 = smul.u32 16, %s26
        %v281 = vld [vmem:[%s275] sm:$0xff]
        %v282 = vld [vmem:[%s275 + $0x8] sm:$0xff]
        %v283 = vld [vmem:[%s275 + $0x10] sm:$0xff]
        %v284 = vld [vmem:[%s275 + $0x18] sm:$0xff]
        %v285 = vld [vmem:[%s275 + $0x20] sm:$0xff]
        %v286 = vld [vmem:[%s275 + $0x28] sm:$0xff]
        %v287 = vld [vmem:[%s275 + $0x30] sm:$0xff]
        %v288 = vld [vmem:[%s275 + $0x38] sm:$0xff]
        %v289 = vld [vmem:[%s275 + $0x40] sm:$0xff]
        %v290 = vld [vmem:[%s275 + $0x48] sm:$0xff]
        %v291 = vld [vmem:[%s275 + $0x50] sm:$0xff]
        %v292 = vld [vmem:[%s275 + $0x58] sm:$0xff]
        %v293 = vld [vmem:[%s275 + $0x60] sm:$0xff]
        %v294 = vld [vmem:[%s275 + $0x68] sm:$0xff]
        %v295 = vld [vmem:[%s275 + $0x70] sm:$0xff]
        %v296 = vld [vmem:[%s275 + $0x78] sm:$0xff]
        %v297 = vld [vmem:[%s1] sm:$0xf]
        %299 = vset.pattern.permute.xlu0 0
        %300 = vperm.xlu0 %299, %v281
        %v301 = vpop.permute.xlu0 %300
        %304 = vset.pattern.permute.xlu0 0
        %305 = vperm.xlu0 %304, %v282
        %v306 = vpop.permute.xlu0 %305
        %309 = vset.pattern.permute.xlu0 0
        %310 = vperm.xlu0 %309, %v283
        %v311 = vpop.permute.xlu0 %310
        %314 = vset.pattern.permute.xlu0 0
        %315 = vperm.xlu0 %314, %v284
        %v316 = vpop.permute.xlu0 %315
        %319 = vset.pattern.permute.xlu0 0
        %320 = vperm.xlu0 %319, %v285
        %v321 = vpop.permute.xlu0 %320
        %324 = vset.pattern.permute.xlu0 0
        %325 = vperm.xlu0 %324, %v286
        %v326 = vpop.permute.xlu0 %325
        %329 = vset.pattern.permute.xlu0 0
        %330 = vperm.xlu0 %329, %v287
        %v331 = vpop.permute.xlu0 %330
        %334 = vset.pattern.permute.xlu0 0
        %335 = vperm.xlu0 %334, %v288
        %v336 = vpop.permute.xlu0 %335
        %339 = vset.pattern.permute.xlu0 0
        %340 = vperm.xlu0 %339, %v289
        %v341 = vpop.permute.xlu0 %340
        %344 = vset.pattern.permute.xlu0 0
        %345 = vperm.xlu0 %344, %v290
        %v346 = vpop.permute.xlu0 %345
        %349 = vset.pattern.permute.xlu0 0
        %350 = vperm.xlu0 %349, %v291
        %v351 = vpop.permute.xlu0 %350
        %354 = vset.pattern.permute.xlu0 0
        %355 = vperm.xlu0 %354, %v292
        %v356 = vpop.permute.xlu0 %355
        %359 = vset.pattern.permute.xlu0 0
        %360 = vperm.xlu0 %359, %v293
        %v361 = vpop.permute.xlu0 %360
        %364 = vset.pattern.permute.xlu0 0
        %365 = vperm.xlu0 %364, %v294
        %v366 = vpop.permute.xlu0 %365
        %369 = vset.pattern.permute.xlu0 0
        %370 = vperm.xlu0 %369, %v295
        %v371 = vpop.permute.xlu0 %370
        %374 = vset.pattern.permute.xlu0 0
        %375 = vperm.xlu0 %374, %v296
        %v376 = vpop.permute.xlu0 %375
        %v379 = vlaneseq
        %v380 = vshrl.u32 %v379, 7
        %v381 = vsub.s32 0, %v380
        %v382 = vrot.slane %v297, %v381
        %v383 = vlaneseq
        %v384 = vshrl.u32 %v383, 7
        %v385 = vsub.s32 1, %v384
        %v386 = vrot.slane %v297, %v385
        %v387 = vlaneseq
        %v388 = vshrl.u32 %v387, 7
        %v389 = vsub.s32 2, %v388
        %v390 = vrot.slane %v297, %v389
        %v391 = vlaneseq
        %v392 = vshrl.u32 %v391, 7
        %v393 = vsub.s32 3, %v392
        %v394 = vrot.slane %v297, %v393
        %v399 = vadd.f32 %v301, %v382
        %v400 = vadd.f32 %v301, %v386
        %v401 = vadd.f32 %v301, %v390
        %v402 = vadd.f32 %v301, %v394
        %v403 = vadd.f32 %v306, %v382
        %v404 = vadd.f32 %v306, %v386
        %v405 = vadd.f32 %v306, %v390
        %v406 = vadd.f32 %v306, %v394
        %v407 = vadd.f32 %v311, %v382
        %v408 = vadd.f32 %v311, %v386
        %v409 = vadd.f32 %v311, %v390
        %v410 = vadd.f32 %v311, %v394
        %v411 = vadd.f32 %v316, %v382
        %v412 = vadd.f32 %v316, %v386
        %v413 = vadd.f32 %v316, %v390
        %v414 = vadd.f32 %v316, %v394
        %v415 = vadd.f32 %v321, %v382
        %v416 = vadd.f32 %v321, %v386
        %v417 = vadd.f32 %v321, %v390
        %v418 = vadd.f32 %v321, %v394
        %v419 = vadd.f32 %v326, %v382
        %v420 = vadd.f32 %v326, %v386
        %v421 = vadd.f32 %v326, %v390
        %v422 = vadd.f32 %v326, %v394
        %v423 = vadd.f32 %v331, %v382
        %v424 = vadd.f32 %v331, %v386
        %v425 = vadd.f32 %v331, %v390
        %v426 = vadd.f32 %v331, %v394
        %v427 = vadd.f32 %v336, %v382
        %v428 = vadd.f32 %v336, %v386
        %v429 = vadd.f32 %v336, %v390
        %v430 = vadd.f32 %v336, %v394
        %v431 = vadd.f32 %v341, %v382
        %v432 = vadd.f32 %v341, %v386
        %v433 = vadd.f32 %v341, %v390
        %v434 = vadd.f32 %v341, %v394
        %v435 = vadd.f32 %v346, %v382
        %v436 = vadd.f32 %v346, %v386
        %v437 = vadd.f32 %v346, %v390
        %v438 = vadd.f32 %v346, %v394
        %v439 = vadd.f32 %v351, %v382
        %v440 = vadd.f32 %v351, %v386
        %v441 = vadd.f32 %v351, %v390
        %v442 = vadd.f32 %v351, %v394
        %v443 = vadd.f32 %v356, %v382
        %v444 = vadd.f32 %v356, %v386
        %v445 = vadd.f32 %v356, %v390
        %v446 = vadd.f32 %v356, %v394
        %v447 = vadd.f32 %v361, %v382
        %v448 = vadd.f32 %v361, %v386
        %v449 = vadd.f32 %v361, %v390
        %v450 = vadd.f32 %v361, %v394
        %v451 = vadd.f32 %v366, %v382
        %v452 = vadd.f32 %v366, %v386
        %v453 = vadd.f32 %v366, %v390
        %v454 = vadd.f32 %v366, %v394
        %v455 = vadd.f32 %v371, %v382
        %v456 = vadd.f32 %v371, %v386
        %v457 = vadd.f32 %v371, %v390
        %v458 = vadd.f32 %v371, %v394
        %v459 = vadd.f32 %v376, %v382
        %v460 = vadd.f32 %v376, %v386
        %v461 = vadd.f32 %v376, %v390
        %v462 = vadd.f32 %v376, %v394
        %v463 = vmul.f32 %v399, 0.2
        %v464 = vmul.f32 %v400, 0.2
        %v465 = vmul.f32 %v401, 0.2
        %v466 = vmul.f32 %v402, 0.2
        %v467 = vmul.f32 %v403, 0.2
        %v468 = vmul.f32 %v404, 0.2
        %v469 = vmul.f32 %v405, 0.2
        %v470 = vmul.f32 %v406, 0.2
        %v471 = vmul.f32 %v407, 0.2
        %v472 = vmul.f32 %v408, 0.2
        %v473 = vmul.f32 %v409, 0.2
        %v474 = vmul.f32 %v410, 0.2
        %v475 = vmul.f32 %v411, 0.2
        %v476 = vmul.f32 %v412, 0.2
        %v477 = vmul.f32 %v413, 0.2
        %v478 = vmul.f32 %v414, 0.2
        %v479 = vmul.f32 %v415, 0.2
        %v480 = vmul.f32 %v416, 0.2
        %v481 = vmul.f32 %v417, 0.2
        %v482 = vmul.f32 %v418, 0.2
        %v483 = vmul.f32 %v419, 0.2
        %v484 = vmul.f32 %v420, 0.2
        %v485 = vmul.f32 %v421, 0.2
        %v486 = vmul.f32 %v422, 0.2
        %v487 = vmul.f32 %v423, 0.2
        %v488 = vmul.f32 %v424, 0.2
        %v489 = vmul.f32 %v425, 0.2
        %v490 = vmul.f32 %v426, 0.2
        %v491 = vmul.f32 %v427, 0.2
        %v492 = vmul.f32 %v428, 0.2
        %v493 = vmul.f32 %v429, 0.2
        %v494 = vmul.f32 %v430, 0.2
        %v495 = vmul.f32 %v431, 0.2
        %v496 = vmul.f32 %v432, 0.2
        %v497 = vmul.f32 %v433, 0.2
        %v498 = vmul.f32 %v434, 0.2
        %v499 = vmul.f32 %v435, 0.2
        %v500 = vmul.f32 %v436, 0.2
        %v501 = vmul.f32 %v437, 0.2
        %v502 = vmul.f32 %v438, 0.2
        %v503 = vmul.f32 %v439, 0.2
        %v504 = vmul.f32 %v440, 0.2
        %v505 = vmul.f32 %v441, 0.2
        %v506 = vmul.f32 %v442, 0.2
        %v507 = vmul.f32 %v443, 0.2
        %v508 = vmul.f32 %v444, 0.2
        %v509 = vmul.f32 %v445, 0.2
        %v510 = vmul.f32 %v446, 0.2
        %v511 = vmul.f32 %v447, 0.2
        %v512 = vmul.f32 %v448, 0.2
        %v513 = vmul.f32 %v449, 0.2
        %v514 = vmul.f32 %v450, 0.2
        %v515 = vmul.f32 %v451, 0.2
        %v516 = vmul.f32 %v452, 0.2
        %v517 = vmul.f32 %v453, 0.2
        %v518 = vmul.f32 %v454, 0.2
        %v519 = vmul.f32 %v455, 0.2
        %v520 = vmul.f32 %v456, 0.2
        %v521 = vmul.f32 %v457, 0.2
        %v522 = vmul.f32 %v458, 0.2
        %v523 = vmul.f32 %v459, 0.2
        %v524 = vmul.f32 %v460, 0.2
        %v525 = vmul.f32 %v461, 0.2
        %v526 = vmul.f32 %v462, 0.2
        %v527 = vmax.f32 %v399, %v463
        %v528 = vmax.f32 %v400, %v464
        %v529 = vmax.f32 %v401, %v465
        %v530 = vmax.f32 %v402, %v466
        %v531 = vmax.f32 %v403, %v467
        %v532 = vmax.f32 %v404, %v468
        %v533 = vmax.f32 %v405, %v469
        %v534 = vmax.f32 %v406, %v470
        %v535 = vmax.f32 %v407, %v471
        %v536 = vmax.f32 %v408, %v472
        %v537 = vmax.f32 %v409, %v473
        %v538 = vmax.f32 %v410, %v474
        %v539 = vmax.f32 %v411, %v475
        %v540 = vmax.f32 %v412, %v476
        %v541 = vmax.f32 %v413, %v477
        %v542 = vmax.f32 %v414, %v478
        %v543 = vmax.f32 %v415, %v479
        %v544 = vmax.f32 %v416, %v480
        %v545 = vmax.f32 %v417, %v481
        %v546 = vmax.f32 %v418, %v482
        %v547 = vmax.f32 %v419, %v483
        %v548 = vmax.f32 %v420, %v484
        %v549 = vmax.f32 %v421, %v485
        %v550 = vmax.f32 %v422, %v486
        %v551 = vmax.f32 %v423, %v487
        %v552 = vmax.f32 %v424, %v488
        %v553 = vmax.f32 %v425, %v489
        %v554 = vmax.f32 %v426, %v490
        %v555 = vmax.f32 %v427, %v491
        %v556 = vmax.f32 %v428, %v492
        %v557 = vmax.f32 %v429, %v493
        %v558 = vmax.f32 %v430, %v494
        %v559 = vmax.f32 %v431, %v495
        %v560 = vmax.f32 %v432, %v496
        %v561 = vmax.f32 %v433, %v497
        %v562 = vmax.f32 %v434, %v498
        %v563 = vmax.f32 %v435, %v499
        %v564 = vmax.f32 %v436, %v500
        %v565 = vmax.f32 %v437, %v501
        %v566 = vmax.f32 %v438, %v502
        %v567 = vmax.f32 %v439, %v503
        %v568 = vmax.f32 %v440, %v504
        %v569 = vmax.f32 %v441, %v505
        %v570 = vmax.f32 %v442, %v506
        %v571 = vmax.f32 %v443, %v507
        %v572 = vmax.f32 %v444, %v508
        %v573 = vmax.f32 %v445, %v509
        %v574 = vmax.f32 %v446, %v510
        %v575 = vmax.f32 %v447, %v511
        %v576 = vmax.f32 %v448, %v512
        %v577 = vmax.f32 %v449, %v513
        %v578 = vmax.f32 %v450, %v514
        %v579 = vmax.f32 %v451, %v515
        %v580 = vmax.f32 %v452, %v516
        %v581 = vmax.f32 %v453, %v517
        %v582 = vmax.f32 %v454, %v518
        %v583 = vmax.f32 %v455, %v519
        %v584 = vmax.f32 %v456, %v520
        %v585 = vmax.f32 %v457, %v521
        %v586 = vmax.f32 %v458, %v522
        %v587 = vmax.f32 %v459, %v523
        %v588 = vmax.f32 %v460, %v524
        %v589 = vmax.f32 %v461, %v525
        %v590 = vmax.f32 %v462, %v526
        %v591 = vld [vmem:[%s234] sm:$0xff]
        %v592 = vld [vmem:[%s234 + $0x8] sm:$0xff]
        %v593 = vld [vmem:[%s234 + $0x10] sm:$0xff]
        %v594 = vld [vmem:[%s234 + $0x18] sm:$0xff]
        %v595 = vld [vmem:[%s234 + $0x20] sm:$0xff]
        %v596 = vld [vmem:[%s234 + $0x28] sm:$0xff]
        %v597 = vld [vmem:[%s234 + $0x30] sm:$0xff]
        %v598 = vld [vmem:[%s234 + $0x38] sm:$0xff]
        %v599 = vld [vmem:[%s234 + $0x40] sm:$0xff]
        %v600 = vld [vmem:[%s234 + $0x48] sm:$0xff]
        %v601 = vld [vmem:[%s234 + $0x50] sm:$0xff]
        %v602 = vld [vmem:[%s234 + $0x58] sm:$0xff]
        %v603 = vld [vmem:[%s234 + $0x60] sm:$0xff]
        %v604 = vld [vmem:[%s234 + $0x68] sm:$0xff]
        %v605 = vld [vmem:[%s234 + $0x70] sm:$0xff]
        %v606 = vld [vmem:[%s234 + $0x78] sm:$0xff]
        %v607 = vld [vmem:[%s234 + $0x80] sm:$0xff]
        %v608 = vld [vmem:[%s234 + $0x88] sm:$0xff]
        %v609 = vld [vmem:[%s234 + $0x90] sm:$0xff]
        %v610 = vld [vmem:[%s234 + $0x98] sm:$0xff]
        %v611 = vld [vmem:[%s234 + $0xa0] sm:$0xff]
        %v612 = vld [vmem:[%s234 + $0xa8] sm:$0xff]
        %v613 = vld [vmem:[%s234 + $0xb0] sm:$0xff]
        %v614 = vld [vmem:[%s234 + $0xb8] sm:$0xff]
        %v615 = vld [vmem:[%s234 + $0xc0] sm:$0xff]
        %v616 = vld [vmem:[%s234 + $0xc8] sm:$0xff]
        %v617 = vld [vmem:[%s234 + $0xd0] sm:$0xff]
        %v618 = vld [vmem:[%s234 + $0xd8] sm:$0xff]
        %v619 = vld [vmem:[%s234 + $0xe0] sm:$0xff]
        %v620 = vld [vmem:[%s234 + $0xe8] sm:$0xff]
        %v621 = vld [vmem:[%s234 + $0xf0] sm:$0xff]
        %v622 = vld [vmem:[%s234 + $0xf8] sm:$0xff]
        %v623 = vld [vmem:[%s234 + $0x100] sm:$0xff]
        %v624 = vld [vmem:[%s234 + $0x108] sm:$0xff]
        %v625 = vld [vmem:[%s234 + $0x110] sm:$0xff]
        %v626 = vld [vmem:[%s234 + $0x118] sm:$0xff]
        %v627 = vld [vmem:[%s234 + $0x120] sm:$0xff]
        %v628 = vld [vmem:[%s234 + $0x128] sm:$0xff]
        %v629 = vld [vmem:[%s234 + $0x130] sm:$0xff]
        %v630 = vld [vmem:[%s234 + $0x138] sm:$0xff]
        %v631 = vld [vmem:[%s234 + $0x140] sm:$0xff]
        %v632 = vld [vmem:[%s234 + $0x148] sm:$0xff]
        %v633 = vld [vmem:[%s234 + $0x150] sm:$0xff]
        %v634 = vld [vmem:[%s234 + $0x158] sm:$0xff]
        %v635 = vld [vmem:[%s234 + $0x160] sm:$0xff]
        %v636 = vld [vmem:[%s234 + $0x168] sm:$0xff]
        %v637 = vld [vmem:[%s234 + $0x170] sm:$0xff]
        %v638 = vld [vmem:[%s234 + $0x178] sm:$0xff]
        %v639 = vld [vmem:[%s234 + $0x180] sm:$0xff]
        %v640 = vld [vmem:[%s234 + $0x188] sm:$0xff]
        %v641 = vld [vmem:[%s234 + $0x190] sm:$0xff]
        %v642 = vld [vmem:[%s234 + $0x198] sm:$0xff]
        %v643 = vld [vmem:[%s234 + $0x1a0] sm:$0xff]
        %v644 = vld [vmem:[%s234 + $0x1a8] sm:$0xff]
        %v645 = vld [vmem:[%s234 + $0x1b0] sm:$0xff]
        %v646 = vld [vmem:[%s234 + $0x1b8] sm:$0xff]
        %v647 = vld [vmem:[%s234 + $0x1c0] sm:$0xff]
        %v648 = vld [vmem:[%s234 + $0x1c8] sm:$0xff]
        %v649 = vld [vmem:[%s234 + $0x1d0] sm:$0xff]
        %v650 = vld [vmem:[%s234 + $0x1d8] sm:$0xff]
        %v651 = vld [vmem:[%s234 + $0x1e0] sm:$0xff]
        %v652 = vld [vmem:[%s234 + $0x1e8] sm:$0xff]
        %v653 = vld [vmem:[%s234 + $0x1f0] sm:$0xff]
        %v654 = vld [vmem:[%s234 + $0x1f8] sm:$0xff]
        %vm655 = vcmp.le.f32.partialorder %v591, 250.0
        %vm656 = vcmp.le.f32.partialorder %v592, 250.0
        %vm657 = vcmp.le.f32.partialorder %v593, 250.0
        %vm658 = vcmp.le.f32.partialorder %v594, 250.0
        %vm659 = vcmp.le.f32.partialorder %v595, 250.0
        %vm660 = vcmp.le.f32.partialorder %v596, 250.0
        %vm661 = vcmp.le.f32.partialorder %v597, 250.0
        %vm662 = vcmp.le.f32.partialorder %v598, 250.0
        %vm663 = vcmp.le.f32.partialorder %v599, 250.0
        %vm664 = vcmp.le.f32.partialorder %v600, 250.0
        %vm665 = vcmp.le.f32.partialorder %v601, 250.0
        %vm666 = vcmp.le.f32.partialorder %v602, 250.0
        %vm667 = vcmp.le.f32.partialorder %v603, 250.0
        %vm668 = vcmp.le.f32.partialorder %v604, 250.0
        %vm669 = vcmp.le.f32.partialorder %v605, 250.0
        %vm670 = vcmp.le.f32.partialorder %v606, 250.0
        %vm671 = vcmp.le.f32.partialorder %v607, 250.0
        %vm672 = vcmp.le.f32.partialorder %v608, 250.0
        %vm673 = vcmp.le.f32.partialorder %v609, 250.0
        %vm674 = vcmp.le.f32.partialorder %v610, 250.0
        %vm675 = vcmp.le.f32.partialorder %v611, 250.0
        %vm676 = vcmp.le.f32.partialorder %v612, 250.0
        %vm677 = vcmp.le.f32.partialorder %v613, 250.0
        %vm678 = vcmp.le.f32.partialorder %v614, 250.0
        %vm679 = vcmp.le.f32.partialorder %v615, 250.0
        %vm680 = vcmp.le.f32.partialorder %v616, 250.0
        %vm681 = vcmp.le.f32.partialorder %v617, 250.0
        %vm682 = vcmp.le.f32.partialorder %v618, 250.0
        %vm683 = vcmp.le.f32.partialorder %v619, 250.0
        %vm684 = vcmp.le.f32.partialorder %v620, 250.0
        %vm685 = vcmp.le.f32.partialorder %v621, 250.0
        %vm686 = vcmp.le.f32.partialorder %v622, 250.0
        %vm687 = vcmp.le.f32.partialorder %v623, 250.0
        %vm688 = vcmp.le.f32.partialorder %v624, 250.0
        %vm689 = vcmp.le.f32.partialorder %v625, 250.0
        %vm690 = vcmp.le.f32.partialorder %v626, 250.0
        %vm691 = vcmp.le.f32.partialorder %v627, 250.0
        %vm692 = vcmp.le.f32.partialorder %v628, 250.0
        %vm693 = vcmp.le.f32.partialorder %v629, 250.0
        %vm694 = vcmp.le.f32.partialorder %v630, 250.0
        %vm695 = vcmp.le.f32.partialorder %v631, 250.0
        %vm696 = vcmp.le.f32.partialorder %v632, 250.0
        %vm697 = vcmp.le.f32.partialorder %v633, 250.0
        %vm698 = vcmp.le.f32.partialorder %v634, 250.0
        %vm699 = vcmp.le.f32.partialorder %v635, 250.0
        %vm700 = vcmp.le.f32.partialorder %v636, 250.0
        %vm701 = vcmp.le.f32.partialorder %v637, 250.0
        %vm702 = vcmp.le.f32.partialorder %v638, 250.0
        %vm703 = vcmp.le.f32.partialorder %v639, 250.0
        %vm704 = vcmp.le.f32.partialorder %v640, 250.0
        %vm705 = vcmp.le.f32.partialorder %v641, 250.0
        %vm706 = vcmp.le.f32.partialorder %v642, 250.0
        %vm707 = vcmp.le.f32.partialorder %v643, 250.0
        %vm708 = vcmp.le.f32.partialorder %v644, 250.0
        %vm709 = vcmp.le.f32.partialorder %v645, 250.0
        %vm710 = vcmp.le.f32.partialorder %v646, 250.0
        %vm711 = vcmp.le.f32.partialorder %v647, 250.0
        %vm712 = vcmp.le.f32.partialorder %v648, 250.0
        %vm713 = vcmp.le.f32.partialorder %v649, 250.0
        %vm714 = vcmp.le.f32.partialorder %v650, 250.0
        %vm715 = vcmp.le.f32.partialorder %v651, 250.0
        %vm716 = vcmp.le.f32.partialorder %v652, 250.0
        %vm717 = vcmp.le.f32.partialorder %v653, 250.0
        %vm718 = vcmp.le.f32.partialorder %v654, 250.0
        %v719 = vsel %vm655, %v527, -1e+10
        %v720 = vsel %vm656, %v528, -1e+10
        %v721 = vsel %vm657, %v529, -1e+10
        %v722 = vsel %vm658, %v530, -1e+10
        %v723 = vsel %vm659, %v531, -1e+10
        %v724 = vsel %vm660, %v532, -1e+10
        %v725 = vsel %vm661, %v533, -1e+10
        %v726 = vsel %vm662, %v534, -1e+10
        %v727 = vsel %vm663, %v535, -1e+10
        %v728 = vsel %vm664, %v536, -1e+10
        %v729 = vsel %vm665, %v537, -1e+10
        %v730 = vsel %vm666, %v538, -1e+10
        %v731 = vsel %vm667, %v539, -1e+10
        %v732 = vsel %vm668, %v540, -1e+10
        %v733 = vsel %vm669, %v541, -1e+10
        %v734 = vsel %vm670, %v542, -1e+10
        %v735 = vsel %vm671, %v543, -1e+10
        %v736 = vsel %vm672, %v544, -1e+10
        %v737 = vsel %vm673, %v545, -1e+10
        %v738 = vsel %vm674, %v546, -1e+10
        %v739 = vsel %vm675, %v547, -1e+10
        %v740 = vsel %vm676, %v548, -1e+10
        %v741 = vsel %vm677, %v549, -1e+10
        %v742 = vsel %vm678, %v550, -1e+10
        %v743 = vsel %vm679, %v551, -1e+10
        %v744 = vsel %vm680, %v552, -1e+10
        %v745 = vsel %vm681, %v553, -1e+10
        %v746 = vsel %vm682, %v554, -1e+10
        %v747 = vsel %vm683, %v555, -1e+10
        %v748 = vsel %vm684, %v556, -1e+10
        %v749 = vsel %vm685, %v557, -1e+10
        %v750 = vsel %vm686, %v558, -1e+10
        %v751 = vsel %vm687, %v559, -1e+10
        %v752 = vsel %vm688, %v560, -1e+10
        %v753 = vsel %vm689, %v561, -1e+10
        %v754 = vsel %vm690, %v562, -1e+10
        %v755 = vsel %vm691, %v563, -1e+10
        %v756 = vsel %vm692, %v564, -1e+10
        %v757 = vsel %vm693, %v565, -1e+10
        %v758 = vsel %vm694, %v566, -1e+10
        %v759 = vsel %vm695, %v567, -1e+10
        %v760 = vsel %vm696, %v568, -1e+10
        %v761 = vsel %vm697, %v569, -1e+10
        %v762 = vsel %vm698, %v570, -1e+10
        %v763 = vsel %vm699, %v571, -1e+10
        %v764 = vsel %vm700, %v572, -1e+10
        %v765 = vsel %vm701, %v573, -1e+10
        %v766 = vsel %vm702, %v574, -1e+10
        %v767 = vsel %vm703, %v575, -1e+10
        %v768 = vsel %vm704, %v576, -1e+10
        %v769 = vsel %vm705, %v577, -1e+10
        %v770 = vsel %vm706, %v578, -1e+10
        %v771 = vsel %vm707, %v579, -1e+10
        %v772 = vsel %vm708, %v580, -1e+10
        %v773 = vsel %vm709, %v581, -1e+10
        %v774 = vsel %vm710, %v582, -1e+10
        %v775 = vsel %vm711, %v583, -1e+10
        %v776 = vsel %vm712, %v584, -1e+10
        %v777 = vsel %vm713, %v585, -1e+10
        %v778 = vsel %vm714, %v586, -1e+10
        %v779 = vsel %vm715, %v587, -1e+10
        %v780 = vsel %vm716, %v588, -1e+10
        %v781 = vsel %vm717, %v589, -1e+10
        %v782 = vsel %vm718, %v590, -1e+10
        %v783 = vmax.f32 %v719, %v720
        %v784 = vmax.f32 %v783, %v721
        %v785 = vmax.f32 %v784, %v722
        %786 = vmax.xlane.f32.xlu0 %v785
        %v787 = vpop.xlane.xlu0 %786
        %v788 = vmax.f32 %v723, %v724
        %v789 = vmax.f32 %v788, %v725
        %v790 = vmax.f32 %v789, %v726
        %791 = vmax.xlane.f32.xlu0 %v790
        %v792 = vpop.xlane.xlu0 %791
        %v793 = vmax.f32 %v727, %v728
        %v794 = vmax.f32 %v793, %v729
        %v795 = vmax.f32 %v794, %v730
        %796 = vmax.xlane.f32.xlu0 %v795
        %v797 = vpop.xlane.xlu0 %796
        %v798 = vmax.f32 %v731, %v732
        %v799 = vmax.f32 %v798, %v733
        %v800 = vmax.f32 %v799, %v734
        %801 = vmax.xlane.f32.xlu0 %v800
        %v802 = vpop.xlane.xlu0 %801
        %v803 = vmax.f32 %v735, %v736
        %v804 = vmax.f32 %v803, %v737
        %v805 = vmax.f32 %v804, %v738
        %806 = vmax.xlane.f32.xlu0 %v805
        %v807 = vpop.xlane.xlu0 %806
        %v808 = vmax.f32 %v739, %v740
        %v809 = vmax.f32 %v808, %v741
        %v810 = vmax.f32 %v809, %v742
        %811 = vmax.xlane.f32.xlu0 %v810
        %v812 = vpop.xlane.xlu0 %811
        %v813 = vmax.f32 %v743, %v744
        %v814 = vmax.f32 %v813, %v745
        %v815 = vmax.f32 %v814, %v746
        %816 = vmax.xlane.f32.xlu0 %v815
        %v817 = vpop.xlane.xlu0 %816
        %v818 = vmax.f32 %v747, %v748
        %v819 = vmax.f32 %v818, %v749
        %v820 = vmax.f32 %v819, %v750
        %821 = vmax.xlane.f32.xlu0 %v820
        %v822 = vpop.xlane.xlu0 %821
        %v823 = vmax.f32 %v751, %v752
        %v824 = vmax.f32 %v823, %v753
        %v825 = vmax.f32 %v824, %v754
        %826 = vmax.xlane.f32.xlu0 %v825
        %v827 = vpop.xlane.xlu0 %826
        %v828 = vmax.f32 %v755, %v756
        %v829 = vmax.f32 %v828, %v757
        %v830 = vmax.f32 %v829, %v758
        %831 = vmax.xlane.f32.xlu0 %v830
        %v832 = vpop.xlane.xlu0 %831
        %v833 = vmax.f32 %v759, %v760
        %v834 = vmax.f32 %v833, %v761
        %v835 = vmax.f32 %v834, %v762
        %836 = vmax.xlane.f32.xlu0 %v835
        %v837 = vpop.xlane.xlu0 %836
        %v838 = vmax.f32 %v763, %v764
        %v839 = vmax.f32 %v838, %v765
        %v840 = vmax.f32 %v839, %v766
        %841 = vmax.xlane.f32.xlu0 %v840
        %v842 = vpop.xlane.xlu0 %841
        %v843 = vmax.f32 %v767, %v768
        %v844 = vmax.f32 %v843, %v769
        %v845 = vmax.f32 %v844, %v770
        %846 = vmax.xlane.f32.xlu0 %v845
        %v847 = vpop.xlane.xlu0 %846
        %v848 = vmax.f32 %v771, %v772
        %v849 = vmax.f32 %v848, %v773
        %v850 = vmax.f32 %v849, %v774
        %851 = vmax.xlane.f32.xlu0 %v850
        %v852 = vpop.xlane.xlu0 %851
        %v853 = vmax.f32 %v775, %v776
        %v854 = vmax.f32 %v853, %v777
        %v855 = vmax.f32 %v854, %v778
        %856 = vmax.xlane.f32.xlu0 %v855
        %v857 = vpop.xlane.xlu0 %856
        %v858 = vmax.f32 %v779, %v780
        %v859 = vmax.f32 %v858, %v781
        %v860 = vmax.f32 %v859, %v782
        %861 = vmax.xlane.f32.xlu0 %v860
        %v862 = vpop.xlane.xlu0 %861
        %v863 = vsub.f32 %v719, %v787
        %v864 = vsub.f32 %v720, %v787
        %v865 = vsub.f32 %v721, %v787
        %v866 = vsub.f32 %v722, %v787
        %v867 = vsub.f32 %v723, %v792
        %v868 = vsub.f32 %v724, %v792
        %v869 = vsub.f32 %v725, %v792
        %v870 = vsub.f32 %v726, %v792
        %v871 = vsub.f32 %v727, %v797
        %v872 = vsub.f32 %v728, %v797
        %v873 = vsub.f32 %v729, %v797
        %v874 = vsub.f32 %v730, %v797
        %v875 = vsub.f32 %v731, %v802
        %v876 = vsub.f32 %v732, %v802
        %v877 = vsub.f32 %v733, %v802
        %v878 = vsub.f32 %v734, %v802
        %v879 = vsub.f32 %v735, %v807
        %v880 = vsub.f32 %v736, %v807
        %v881 = vsub.f32 %v737, %v807
        %v882 = vsub.f32 %v738, %v807
        %v883 = vsub.f32 %v739, %v812
        %v884 = vsub.f32 %v740, %v812
        %v885 = vsub.f32 %v741, %v812
        %v886 = vsub.f32 %v742, %v812
        %v887 = vsub.f32 %v743, %v817
        %v888 = vsub.f32 %v744, %v817
        %v889 = vsub.f32 %v745, %v817
        %v890 = vsub.f32 %v746, %v817
        %v891 = vsub.f32 %v747, %v822
        %v892 = vsub.f32 %v748, %v822
        %v893 = vsub.f32 %v749, %v822
        %v894 = vsub.f32 %v750, %v822
        %v895 = vsub.f32 %v751, %v827
        %v896 = vsub.f32 %v752, %v827
        %v897 = vsub.f32 %v753, %v827
        %v898 = vsub.f32 %v754, %v827
        %v899 = vsub.f32 %v755, %v832
        %v900 = vsub.f32 %v756, %v832
        %v901 = vsub.f32 %v757, %v832
        %v902 = vsub.f32 %v758, %v832
        %v903 = vsub.f32 %v759, %v837
        %v904 = vsub.f32 %v760, %v837
        %v905 = vsub.f32 %v761, %v837
        %v906 = vsub.f32 %v762, %v837
        %v907 = vsub.f32 %v763, %v842
        %v908 = vsub.f32 %v764, %v842
        %v909 = vsub.f32 %v765, %v842
        %v910 = vsub.f32 %v766, %v842
        %v911 = vsub.f32 %v767, %v847
        %v912 = vsub.f32 %v768, %v847
        %v913 = vsub.f32 %v769, %v847
        %v914 = vsub.f32 %v770, %v847
        %v915 = vsub.f32 %v771, %v852
        %v916 = vsub.f32 %v772, %v852
        %v917 = vsub.f32 %v773, %v852
        %v918 = vsub.f32 %v774, %v852
        %v919 = vsub.f32 %v775, %v857
        %v920 = vsub.f32 %v776, %v857
        %v921 = vsub.f32 %v777, %v857
        %v922 = vsub.f32 %v778, %v857
        %v923 = vsub.f32 %v779, %v862
        %v924 = vsub.f32 %v780, %v862
        %v925 = vsub.f32 %v781, %v862
        %v926 = vsub.f32 %v782, %v862
        %v927 = vmul.f32 %v863, 1.442695
        %v928 = vpow.pop %v927
        %v929 = vmul.f32 %v864, 1.442695
        %v930 = vpow.pop %v929
        %v931 = vmul.f32 %v865, 1.442695
        %v932 = vpow.pop %v931
        %v933 = vmul.f32 %v866, 1.442695
        %v934 = vpow.pop %v933
        %v935 = vmul.f32 %v867, 1.442695
        %v936 = vpow.pop %v935
        %v937 = vmul.f32 %v868, 1.442695
        %v938 = vpow.pop %v937
        %v939 = vmul.f32 %v869, 1.442695
        %v940 = vpow.pop %v939
        %v941 = vmul.f32 %v870, 1.442695
        %v942 = vpow.pop %v941
        %v943 = vmul.f32 %v871, 1.442695
        %v944 = vpow.pop %v943
        %v945 = vmul.f32 %v872, 1.442695
        %v946 = vpow.pop %v945
        %v947 = vmul.f32 %v873, 1.442695
        %v948 = vpow.pop %v947
        %v949 = vmul.f32 %v874, 1.442695
        %v950 = vpow.pop %v949
        %v951 = vmul.f32 %v875, 1.442695
        %v952 = vpow.pop %v951
        %v953 = vmul.f32 %v876, 1.442695
        %v954 = vpow.pop %v953
        %v955 = vmul.f32 %v877, 1.442695
        %v956 = vpow.pop %v955
        %v957 = vmul.f32 %v878, 1.442695
        %v958 = vpow.pop %v957
        %v959 = vmul.f32 %v879, 1.442695
        %v960 = vpow.pop %v959
        %v961 = vmul.f32 %v880, 1.442695
        %v962 = vpow.pop %v961
        %v963 = vmul.f32 %v881, 1.442695
        %v964 = vpow.pop %v963
        %v965 = vmul.f32 %v882, 1.442695
        %v966 = vpow.pop %v965
        %v967 = vmul.f32 %v883, 1.442695
        %v968 = vpow.pop %v967
        %v969 = vmul.f32 %v884, 1.442695
        %v970 = vpow.pop %v969
        %v971 = vmul.f32 %v885, 1.442695
        %v972 = vpow.pop %v971
        %v973 = vmul.f32 %v886, 1.442695
        %v974 = vpow.pop %v973
        %v975 = vmul.f32 %v887, 1.442695
        %v976 = vpow.pop %v975
        %v977 = vmul.f32 %v888, 1.442695
        %v978 = vpow.pop %v977
        %v979 = vmul.f32 %v889, 1.442695
        %v980 = vpow.pop %v979
        %v981 = vmul.f32 %v890, 1.442695
        %v982 = vpow.pop %v981
        %v983 = vmul.f32 %v891, 1.442695
        %v984 = vpow.pop %v983
        %v985 = vmul.f32 %v892, 1.442695
        %v986 = vpow.pop %v985
        %v987 = vmul.f32 %v893, 1.442695
        %v988 = vpow.pop %v987
        %v989 = vmul.f32 %v894, 1.442695
        %v990 = vpow.pop %v989
        %v991 = vmul.f32 %v895, 1.442695
        %v992 = vpow.pop %v991
        %v993 = vmul.f32 %v896, 1.442695
        %v994 = vpow.pop %v993
        %v995 = vmul.f32 %v897, 1.442695
        %v996 = vpow.pop %v995
        %v997 = vmul.f32 %v898, 1.442695
        %v998 = vpow.pop %v997
        %v999 = vmul.f32 %v899, 1.442695
        %v1000 = vpow.pop %v999
        %v1001 = vmul.f32 %v900, 1.442695
        %v1002 = vpow.pop %v1001
        %v1003 = vmul.f32 %v901, 1.442695
        %v1004 = vpow.pop %v1003
        %v1005 = vmul.f32 %v902, 1.442695
        %v1006 = vpow.pop %v1005
        %v1007 = vmul.f32 %v903, 1.442695
        %v1008 = vpow.pop %v1007
        %v1009 = vmul.f32 %v904, 1.442695
        %v1010 = vpow.pop %v1009
        %v1011 = vmul.f32 %v905, 1.442695
        %v1012 = vpow.pop %v1011
        %v1013 = vmul.f32 %v906, 1.442695
        %v1014 = vpow.pop %v1013
        %v1015 = vmul.f32 %v907, 1.442695
        %v1016 = vpow.pop %v1015
        %v1017 = vmul.f32 %v908, 1.442695
        %v1018 = vpow.pop %v1017
        %v1019 = vmul.f32 %v909, 1.442695
        %v1020 = vpow.pop %v1019
        %v1021 = vmul.f32 %v910, 1.442695
        %v1022 = vpow.pop %v1021
        %v1023 = vmul.f32 %v911, 1.442695
        %v1024 = vpow.pop %v1023
        %v1025 = vmul.f32 %v912, 1.442695
        %v1026 = vpow.pop %v1025
        %v1027 = vmul.f32 %v913, 1.442695
        %v1028 = vpow.pop %v1027
        %v1029 = vmul.f32 %v914, 1.442695
        %v1030 = vpow.pop %v1029
        %v1031 = vmul.f32 %v915, 1.442695
        %v1032 = vpow.pop %v1031
        %v1033 = vmul.f32 %v916, 1.442695
        %v1034 = vpow.pop %v1033
        %v1035 = vmul.f32 %v917, 1.442695
        %v1036 = vpow.pop %v1035
        %v1037 = vmul.f32 %v918, 1.442695
        %v1038 = vpow.pop %v1037
        %v1039 = vmul.f32 %v919, 1.442695
        %v1040 = vpow.pop %v1039
        %v1041 = vmul.f32 %v920, 1.442695
        %v1042 = vpow.pop %v1041
        %v1043 = vmul.f32 %v921, 1.442695
        %v1044 = vpow.pop %v1043
        %v1045 = vmul.f32 %v922, 1.442695
        %v1046 = vpow.pop %v1045
        %v1047 = vmul.f32 %v923, 1.442695
        %v1048 = vpow.pop %v1047
        %v1049 = vmul.f32 %v924, 1.442695
        %v1050 = vpow.pop %v1049
        %v1051 = vmul.f32 %v925, 1.442695
        %v1052 = vpow.pop %v1051
        %v1053 = vmul.f32 %v926, 1.442695
        %v1054 = vpow.pop %v1053
        %v1055 = vadd.f32 %v928, %v930
        %v1056 = vadd.f32 %v1055, %v932
        %v1057 = vadd.f32 %v1056, %v934
        %1058 = vadd.xlane.f32.xlu0 %v1057
        %v1059 = vpop.xlane.xlu0 %1058
        %v1060 = vadd.f32 %v936, %v938
        %v1061 = vadd.f32 %v1060, %v940
        %v1062 = vadd.f32 %v1061, %v942
        %1063 = vadd.xlane.f32.xlu0 %v1062
        %v1064 = vpop.xlane.xlu0 %1063
        %v1065 = vadd.f32 %v944, %v946
        %v1066 = vadd.f32 %v1065, %v948
        %v1067 = vadd.f32 %v1066, %v950
        %1068 = vadd.xlane.f32.xlu0 %v1067
        %v1069 = vpop.xlane.xlu0 %1068
        %v1070 = vadd.f32 %v952, %v954
        %v1071 = vadd.f32 %v1070, %v956
        %v1072 = vadd.f32 %v1071, %v958
        %1073 = vadd.xlane.f32.xlu0 %v1072
        %v1074 = vpop.xlane.xlu0 %1073
        %v1075 = vadd.f32 %v960, %v962
        %v1076 = vadd.f32 %v1075, %v964
        %v1077 = vadd.f32 %v1076, %v966
        %1078 = vadd.xlane.f32.xlu0 %v1077
        %v1079 = vpop.xlane.xlu0 %1078
        %v1080 = vadd.f32 %v968, %v970
        %v1081 = vadd.f32 %v1080, %v972
        %v1082 = vadd.f32 %v1081, %v974
        %1083 = vadd.xlane.f32.xlu0 %v1082
        %v1084 = vpop.xlane.xlu0 %1083
        %v1085 = vadd.f32 %v976, %v978
        %v1086 = vadd.f32 %v1085, %v980
        %v1087 = vadd.f32 %v1086, %v982
        %1088 = vadd.xlane.f32.xlu0 %v1087
        %v1089 = vpop.xlane.xlu0 %1088
        %v1090 = vadd.f32 %v984, %v986
        %v1091 = vadd.f32 %v1090, %v988
        %v1092 = vadd.f32 %v1091, %v990
        %1093 = vadd.xlane.f32.xlu0 %v1092
        %v1094 = vpop.xlane.xlu0 %1093
        %v1095 = vadd.f32 %v992, %v994
        %v1096 = vadd.f32 %v1095, %v996
        %v1097 = vadd.f32 %v1096, %v998
        %1098 = vadd.xlane.f32.xlu0 %v1097
        %v1099 = vpop.xlane.xlu0 %1098
        %v1100 = vadd.f32 %v1000, %v1002
        %v1101 = vadd.f32 %v1100, %v1004
        %v1102 = vadd.f32 %v1101, %v1006
        %1103 = vadd.xlane.f32.xlu0 %v1102
        %v1104 = vpop.xlane.xlu0 %1103
        %v1105 = vadd.f32 %v1008, %v1010
        %v1106 = vadd.f32 %v1105, %v1012
        %v1107 = vadd.f32 %v1106, %v1014
        %1108 = vadd.xlane.f32.xlu0 %v1107
        %v1109 = vpop.xlane.xlu0 %1108
        %v1110 = vadd.f32 %v1016, %v1018
        %v1111 = vadd.f32 %v1110, %v1020
        %v1112 = vadd.f32 %v1111, %v1022
        %1113 = vadd.xlane.f32.xlu0 %v1112
        %v1114 = vpop.xlane.xlu0 %1113
        %v1115 = vadd.f32 %v1024, %v1026
        %v1116 = vadd.f32 %v1115, %v1028
        %v1117 = vadd.f32 %v1116, %v1030
        %1118 = vadd.xlane.f32.xlu0 %v1117
        %v1119 = vpop.xlane.xlu0 %1118
        %v1120 = vadd.f32 %v1032, %v1034
        %v1121 = vadd.f32 %v1120, %v1036
        %v1122 = vadd.f32 %v1121, %v1038
        %1123 = vadd.xlane.f32.xlu0 %v1122
        %v1124 = vpop.xlane.xlu0 %1123
        %v1125 = vadd.f32 %v1040, %v1042
        %v1126 = vadd.f32 %v1125, %v1044
        %v1127 = vadd.f32 %v1126, %v1046
        %1128 = vadd.xlane.f32.xlu0 %v1127
        %v1129 = vpop.xlane.xlu0 %1128
        %v1130 = vadd.f32 %v1048, %v1050
        %v1131 = vadd.f32 %v1130, %v1052
        %v1132 = vadd.f32 %v1131, %v1054
        %1133 = vadd.xlane.f32.xlu0 %v1132
        %v1134 = vpop.xlane.xlu0 %1133
        %v1135 = vrcp.pop %v1059
        %v1136 = vrcp.pop %v1064
        %v1137 = vrcp.pop %v1069
        %v1138 = vrcp.pop %v1074
        %v1139 = vrcp.pop %v1079
        %v1140 = vrcp.pop %v1084
        %v1141 = vrcp.pop %v1089
        %v1142 = vrcp.pop %v1094
        %v1143 = vrcp.pop %v1099
        %v1144 = vrcp.pop %v1104
        %v1145 = vrcp.pop %v1109
        %v1146 = vrcp.pop %v1114
        %v1147 = vrcp.pop %v1119
        %v1148 = vrcp.pop %v1124
        %v1149 = vrcp.pop %v1129
        %v1150 = vrcp.pop %v1134
        %v1151 = vmul.f32 %v928, %v1135
        %v1152 = vmul.f32 %v930, %v1135
        %v1153 = vmul.f32 %v932, %v1135
        %v1154 = vmul.f32 %v934, %v1135
        %v1155 = vmul.f32 %v936, %v1136
        %v1156 = vmul.f32 %v938, %v1136
        %v1157 = vmul.f32 %v940, %v1136
        %v1158 = vmul.f32 %v942, %v1136
        %v1159 = vmul.f32 %v944, %v1137
        %v1160 = vmul.f32 %v946, %v1137
        %v1161 = vmul.f32 %v948, %v1137
        %v1162 = vmul.f32 %v950, %v1137
        %v1163 = vmul.f32 %v952, %v1138
        %v1164 = vmul.f32 %v954, %v1138
        %v1165 = vmul.f32 %v956, %v1138
        %v1166 = vmul.f32 %v958, %v1138
        %v1167 = vmul.f32 %v960, %v1139
        %v1168 = vmul.f32 %v962, %v1139
        %v1169 = vmul.f32 %v964, %v1139
        %v1170 = vmul.f32 %v966, %v1139
        %v1171 = vmul.f32 %v968, %v1140
        %v1172 = vmul.f32 %v970, %v1140
        %v1173 = vmul.f32 %v972, %v1140
        %v1174 = vmul.f32 %v974, %v1140
        %v1175 = vmul.f32 %v976, %v1141
        %v1176 = vmul.f32 %v978, %v1141
        %v1177 = vmul.f32 %v980, %v1141
        %v1178 = vmul.f32 %v982, %v1141
        %v1179 = vmul.f32 %v984, %v1142
        %v1180 = vmul.f32 %v986, %v1142
        %v1181 = vmul.f32 %v988, %v1142
        %v1182 = vmul.f32 %v990, %v1142
        %v1183 = vmul.f32 %v992, %v1143
        %v1184 = vmul.f32 %v994, %v1143
        %v1185 = vmul.f32 %v996, %v1143
        %v1186 = vmul.f32 %v998, %v1143
        %v1187 = vmul.f32 %v1000, %v1144
        %v1188 = vmul.f32 %v1002, %v1144
        %v1189 = vmul.f32 %v1004, %v1144
        %v1190 = vmul.f32 %v1006, %v1144
        %v1191 = vmul.f32 %v1008, %v1145
        %v1192 = vmul.f32 %v1010, %v1145
        %v1193 = vmul.f32 %v1012, %v1145
        %v1194 = vmul.f32 %v1014, %v1145
        %v1195 = vmul.f32 %v1016, %v1146
        %v1196 = vmul.f32 %v1018, %v1146
        %v1197 = vmul.f32 %v1020, %v1146
        %v1198 = vmul.f32 %v1022, %v1146
        %v1199 = vmul.f32 %v1024, %v1147
        %v1200 = vmul.f32 %v1026, %v1147
        %v1201 = vmul.f32 %v1028, %v1147
        %v1202 = vmul.f32 %v1030, %v1147
        %v1203 = vmul.f32 %v1032, %v1148
        %v1204 = vmul.f32 %v1034, %v1148
        %v1205 = vmul.f32 %v1036, %v1148
        %v1206 = vmul.f32 %v1038, %v1148
        %v1207 = vmul.f32 %v1040, %v1149
        %v1208 = vmul.f32 %v1042, %v1149
        %v1209 = vmul.f32 %v1044, %v1149
        %v1210 = vmul.f32 %v1046, %v1149
        %v1211 = vmul.f32 %v1048, %v1150
        %v1212 = vmul.f32 %v1050, %v1150
        %v1213 = vmul.f32 %v1052, %v1150
        %v1214 = vmul.f32 %v1054, %v1150
        %1215 = vst [vmem:[%s270] sm:$0xff] %v1151
        %1216 = vst [vmem:[%s270 + $0x8] sm:$0xff] %v1152
        %1217 = vst [vmem:[%s270 + $0x10] sm:$0xff] %v1153
        %1218 = vst [vmem:[%s270 + $0x18] sm:$0xff] %v1154
        %1219 = vst [vmem:[%s270 + $0x20] sm:$0xff] %v1155
        %1220 = vst [vmem:[%s270 + $0x28] sm:$0xff] %v1156
        %1221 = vst [vmem:[%s270 + $0x30] sm:$0xff] %v1157
        %1222 = vst [vmem:[%s270 + $0x38] sm:$0xff] %v1158
        %1223 = vst [vmem:[%s270 + $0x40] sm:$0xff] %v1159
        %1224 = vst [vmem:[%s270 + $0x48] sm:$0xff] %v1160
        %1225 = vst [vmem:[%s270 + $0x50] sm:$0xff] %v1161
        %1226 = vst [vmem:[%s270 + $0x58] sm:$0xff] %v1162
        %1227 = vst [vmem:[%s270 + $0x60] sm:$0xff] %v1163
        %1228 = vst [vmem:[%s270 + $0x68] sm:$0xff] %v1164
        %1229 = vst [vmem:[%s270 + $0x70] sm:$0xff] %v1165
        %1230 = vst [vmem:[%s270 + $0x78] sm:$0xff] %v1166
        %1231 = vst [vmem:[%s270 + $0x80] sm:$0xff] %v1167
        %1232 = vst [vmem:[%s270 + $0x88] sm:$0xff] %v1168
        %1233 = vst [vmem:[%s270 + $0x90] sm:$0xff] %v1169
        %1234 = vst [vmem:[%s270 + $0x98] sm:$0xff] %v1170
        %1235 = vst [vmem:[%s270 + $0xa0] sm:$0xff] %v1171
        %1236 = vst [vmem:[%s270 + $0xa8] sm:$0xff] %v1172
        %1237 = vst [vmem:[%s270 + $0xb0] sm:$0xff] %v1173
        %1238 = vst [vmem:[%s270 + $0xb8] sm:$0xff] %v1174
        %1239 = vst [vmem:[%s270 + $0xc0] sm:$0xff] %v1175
        %1240 = vst [vmem:[%s270 + $0xc8] sm:$0xff] %v1176
        %1241 = vst [vmem:[%s270 + $0xd0] sm:$0xff] %v1177
        %1242 = vst [vmem:[%s270 + $0xd8] sm:$0xff] %v1178
        %1243 = vst [vmem:[%s270 + $0xe0] sm:$0xff] %v1179
        %1244 = vst [vmem:[%s270 + $0xe8] sm:$0xff] %v1180
        %1245 = vst [vmem:[%s270 + $0xf0] sm:$0xff] %v1181
        %1246 = vst [vmem:[%s270 + $0xf8] sm:$0xff] %v1182
        %1247 = vst [vmem:[%s270 + $0x100] sm:$0xff] %v1183
        %1248 = vst [vmem:[%s270 + $0x108] sm:$0xff] %v1184
        %1249 = vst [vmem:[%s270 + $0x110] sm:$0xff] %v1185
        %1250 = vst [vmem:[%s270 + $0x118] sm:$0xff] %v1186
        %1251 = vst [vmem:[%s270 + $0x120] sm:$0xff] %v1187
        %1252 = vst [vmem:[%s270 + $0x128] sm:$0xff] %v1188
        %1253 = vst [vmem:[%s270 + $0x130] sm:$0xff] %v1189
        %1254 = vst [vmem:[%s270 + $0x138] sm:$0xff] %v1190
        %1255 = vst [vmem:[%s270 + $0x140] sm:$0xff] %v1191
        %1256 = vst [vmem:[%s270 + $0x148] sm:$0xff] %v1192
        %1257 = vst [vmem:[%s270 + $0x150] sm:$0xff] %v1193
        %1258 = vst [vmem:[%s270 + $0x158] sm:$0xff] %v1194
        %1259 = vst [vmem:[%s270 + $0x160] sm:$0xff] %v1195
        %1260 = vst [vmem:[%s270 + $0x168] sm:$0xff] %v1196
        %1261 = vst [vmem:[%s270 + $0x170] sm:$0xff] %v1197
        %1262 = vst [vmem:[%s270 + $0x178] sm:$0xff] %v1198
        %1263 = vst [vmem:[%s270 + $0x180] sm:$0xff] %v1199
        %1264 = vst [vmem:[%s270 + $0x188] sm:$0xff] %v1200
        %1265 = vst [vmem:[%s270 + $0x190] sm:$0xff] %v1201
        %1266 = vst [vmem:[%s270 + $0x198] sm:$0xff] %v1202
        %1267 = vst [vmem:[%s270 + $0x1a0] sm:$0xff] %v1203
        %1268 = vst [vmem:[%s270 + $0x1a8] sm:$0xff] %v1204
        %1269 = vst [vmem:[%s270 + $0x1b0] sm:$0xff] %v1205
        %1270 = vst [vmem:[%s270 + $0x1b8] sm:$0xff] %v1206
        %1271 = vst [vmem:[%s270 + $0x1c0] sm:$0xff] %v1207
        %1272 = vst [vmem:[%s270 + $0x1c8] sm:$0xff] %v1208
        %1273 = vst [vmem:[%s270 + $0x1d0] sm:$0xff] %v1209
        %1274 = vst [vmem:[%s270 + $0x1d8] sm:$0xff] %v1210
        %1275 = vst [vmem:[%s270 + $0x1e0] sm:$0xff] %v1211
        %1276 = vst [vmem:[%s270 + $0x1e8] sm:$0xff] %v1212
        %1277 = vst [vmem:[%s270 + $0x1f0] sm:$0xff] %v1213
        %1278 = vst [vmem:[%s270 + $0x1f8] sm:$0xff] %v1214
        %v1279 = vpack.c.bf16 %v1155, %v1151
        %v1280 = vpack.c.bf16 %v1156, %v1152
        %v1281 = vpack.c.bf16 %v1157, %v1153
        %v1282 = vpack.c.bf16 %v1158, %v1154
        %v1283 = vpack.c.bf16 %v1163, %v1159
        %v1284 = vpack.c.bf16 %v1164, %v1160
        %v1285 = vpack.c.bf16 %v1165, %v1161
        %v1286 = vpack.c.bf16 %v1166, %v1162
        %v1287 = vpack.c.bf16 %v1171, %v1167
        %v1288 = vpack.c.bf16 %v1172, %v1168
        %v1289 = vpack.c.bf16 %v1173, %v1169
        %v1290 = vpack.c.bf16 %v1174, %v1170
        %v1291 = vpack.c.bf16 %v1179, %v1175
        %v1292 = vpack.c.bf16 %v1180, %v1176
        %v1293 = vpack.c.bf16 %v1181, %v1177
        %v1294 = vpack.c.bf16 %v1182, %v1178
        %v1295 = vpack.c.bf16 %v1187, %v1183
        %v1296 = vpack.c.bf16 %v1188, %v1184
        %v1297 = vpack.c.bf16 %v1189, %v1185
        %v1298 = vpack.c.bf16 %v1190, %v1186
        %v1299 = vpack.c.bf16 %v1195, %v1191
        %v1300 = vpack.c.bf16 %v1196, %v1192
        %v1301 = vpack.c.bf16 %v1197, %v1193
        %v1302 = vpack.c.bf16 %v1198, %v1194
        %v1303 = vpack.c.bf16 %v1203, %v1199
        %v1304 = vpack.c.bf16 %v1204, %v1200
        %v1305 = vpack.c.bf16 %v1205, %v1201
        %v1306 = vpack.c.bf16 %v1206, %v1202
        %v1307 = vpack.c.bf16 %v1211, %v1207
        %v1308 = vpack.c.bf16 %v1212, %v1208
        %v1309 = vpack.c.bf16 %v1213, %v1209
        %v1310 = vpack.c.bf16 %v1214, %v1210
        %v1311 = vld [vmem:[%s3] sm:$0xf]
        %v1312 = vld [vmem:[%s3 + $0x4] sm:$0xf]
        %v1313 = vld [vmem:[%s3 + $0x8] sm:$0xf]
        %v1314 = vld [vmem:[%s3 + $0xc] sm:$0xf]
        %v1315 = vld [vmem:[%s3 + $0x10] sm:$0xf]
        %v1316 = vld [vmem:[%s3 + $0x14] sm:$0xf]
        %v1317 = vld [vmem:[%s3 + $0x18] sm:$0xf]
        %v1318 = vld [vmem:[%s3 + $0x1c] sm:$0xf]
        %v1319 = vld [vmem:[%s3 + $0x20] sm:$0xf]
        %v1320 = vld [vmem:[%s3 + $0x24] sm:$0xf]
        %v1321 = vld [vmem:[%s3 + $0x28] sm:$0xf]
        %v1322 = vld [vmem:[%s3 + $0x2c] sm:$0xf]
        %v1323 = vld [vmem:[%s3 + $0x30] sm:$0xf]
        %v1324 = vld [vmem:[%s3 + $0x34] sm:$0xf]
        %v1325 = vld [vmem:[%s3 + $0x38] sm:$0xf]
        %v1326 = vld [vmem:[%s3 + $0x3c] sm:$0xf]
        %v1327 = vld [vmem:[%s3 + $0x40] sm:$0xf]
        %v1328 = vld [vmem:[%s3 + $0x44] sm:$0xf]
        %v1329 = vld [vmem:[%s3 + $0x48] sm:$0xf]
        %v1330 = vld [vmem:[%s3 + $0x4c] sm:$0xf]
        %v1331 = vld [vmem:[%s3 + $0x50] sm:$0xf]
        %v1332 = vld [vmem:[%s3 + $0x54] sm:$0xf]
        %v1333 = vld [vmem:[%s3 + $0x58] sm:$0xf]
        %v1334 = vld [vmem:[%s3 + $0x5c] sm:$0xf]
        %v1335 = vld [vmem:[%s3 + $0x60] sm:$0xf]
        %v1336 = vld [vmem:[%s3 + $0x64] sm:$0xf]
        %v1337 = vld [vmem:[%s3 + $0x68] sm:$0xf]
        %v1338 = vld [vmem:[%s3 + $0x6c] sm:$0xf]
        %v1339 = vld [vmem:[%s3 + $0x70] sm:$0xf]
        %v1340 = vld [vmem:[%s3 + $0x74] sm:$0xf]
        %v1341 = vld [vmem:[%s3 + $0x78] sm:$0xf]
        %v1342 = vld [vmem:[%s3 + $0x7c] sm:$0xf]
        %v1343 = vld [vmem:[%s3 + $0x80] sm:$0xf]
        %v1344 = vld [vmem:[%s3 + $0x84] sm:$0xf]
        %v1345 = vld [vmem:[%s3 + $0x88] sm:$0xf]
        %v1346 = vld [vmem:[%s3 + $0x8c] sm:$0xf]
        %v1347 = vld [vmem:[%s3 + $0x90] sm:$0xf]
        %v1348 = vld [vmem:[%s3 + $0x94] sm:$0xf]
        %v1349 = vld [vmem:[%s3 + $0x98] sm:$0xf]
        %v1350 = vld [vmem:[%s3 + $0x9c] sm:$0xf]
        %v1351 = vld [vmem:[%s3 + $0xa0] sm:$0xf]
        %v1352 = vld [vmem:[%s3 + $0xa4] sm:$0xf]
        %v1353 = vld [vmem:[%s3 + $0xa8] sm:$0xf]
        %v1354 = vld [vmem:[%s3 + $0xac] sm:$0xf]
        %v1355 = vld [vmem:[%s3 + $0xb0] sm:$0xf]
        %v1356 = vld [vmem:[%s3 + $0xb4] sm:$0xf]
        %v1357 = vld [vmem:[%s3 + $0xb8] sm:$0xf]
        %v1358 = vld [vmem:[%s3 + $0xbc] sm:$0xf]
        %v1359 = vld [vmem:[%s3 + $0xc0] sm:$0xf]
        %v1360 = vld [vmem:[%s3 + $0xc4] sm:$0xf]
        %v1361 = vld [vmem:[%s3 + $0xc8] sm:$0xf]
        %v1362 = vld [vmem:[%s3 + $0xcc] sm:$0xf]
        %v1363 = vld [vmem:[%s3 + $0xd0] sm:$0xf]
        %v1364 = vld [vmem:[%s3 + $0xd4] sm:$0xf]
        %v1365 = vld [vmem:[%s3 + $0xd8] sm:$0xf]
        %v1366 = vld [vmem:[%s3 + $0xdc] sm:$0xf]
        %v1367 = vld [vmem:[%s3 + $0xe0] sm:$0xf]
        %v1368 = vld [vmem:[%s3 + $0xe4] sm:$0xf]
        %v1369 = vld [vmem:[%s3 + $0xe8] sm:$0xf]
        %v1370 = vld [vmem:[%s3 + $0xec] sm:$0xf]
        %v1371 = vld [vmem:[%s3 + $0xf0] sm:$0xf]
        %v1372 = vld [vmem:[%s3 + $0xf4] sm:$0xf]
        %v1373 = vld [vmem:[%s3 + $0xf8] sm:$0xf]
        %v1374 = vld [vmem:[%s3 + $0xfc] sm:$0xf]
        %v1439 = vunpack.c.l.b16 %v1311
        %v1440 = vunpack.c.l.b16 %v1312
        %v1441 = vunpack.c.l.b16 %v1313
        %v1442 = vunpack.c.l.b16 %v1314
        %v1443 = vunpack.c.l.b16 %v1315
        %v1444 = vunpack.c.l.b16 %v1316
        %v1445 = vunpack.c.l.b16 %v1317
        %v1446 = vunpack.c.l.b16 %v1318
        %v1447 = vunpack.c.l.b16 %v1319
        %v1448 = vunpack.c.l.b16 %v1320
        %v1449 = vunpack.c.l.b16 %v1321
        %v1450 = vunpack.c.l.b16 %v1322
        %v1451 = vunpack.c.l.b16 %v1323
        %v1452 = vunpack.c.l.b16 %v1324
        %v1453 = vunpack.c.l.b16 %v1325
        %v1454 = vunpack.c.l.b16 %v1326
        %v1455 = vunpack.c.l.b16 %v1327
        %v1456 = vunpack.c.l.b16 %v1328
        %v1457 = vunpack.c.l.b16 %v1329
        %v1458 = vunpack.c.l.b16 %v1330
        %v1459 = vunpack.c.l.b16 %v1331
        %v1460 = vunpack.c.l.b16 %v1332
        %v1461 = vunpack.c.l.b16 %v1333
        %v1462 = vunpack.c.l.b16 %v1334
        %v1463 = vunpack.c.l.b16 %v1335
        %v1464 = vunpack.c.l.b16 %v1336
        %v1465 = vunpack.c.l.b16 %v1337
        %v1466 = vunpack.c.l.b16 %v1338
        %v1467 = vunpack.c.l.b16 %v1339
        %v1468 = vunpack.c.l.b16 %v1340
        %v1469 = vunpack.c.l.b16 %v1341
        %v1470 = vunpack.c.l.b16 %v1342
        %v1471 = vunpack.c.l.b16 %v1343
        %v1472 = vunpack.c.l.b16 %v1344
        %v1473 = vunpack.c.l.b16 %v1345
        %v1474 = vunpack.c.l.b16 %v1346
        %v1475 = vunpack.c.l.b16 %v1347
        %v1476 = vunpack.c.l.b16 %v1348
        %v1477 = vunpack.c.l.b16 %v1349
        %v1478 = vunpack.c.l.b16 %v1350
        %v1479 = vunpack.c.l.b16 %v1351
        %v1480 = vunpack.c.l.b16 %v1352
        %v1481 = vunpack.c.l.b16 %v1353
        %v1482 = vunpack.c.l.b16 %v1354
        %v1483 = vunpack.c.l.b16 %v1355
        %v1484 = vunpack.c.l.b16 %v1356
        %v1485 = vunpack.c.l.b16 %v1357
        %v1486 = vunpack.c.l.b16 %v1358
        %v1487 = vunpack.c.l.b16 %v1359
        %v1488 = vunpack.c.l.b16 %v1360
        %v1489 = vunpack.c.l.b16 %v1361
        %v1490 = vunpack.c.l.b16 %v1362
        %v1491 = vunpack.c.l.b16 %v1363
        %v1492 = vunpack.c.l.b16 %v1364
        %v1493 = vunpack.c.l.b16 %v1365
        %v1494 = vunpack.c.l.b16 %v1366
        %v1495 = vunpack.c.l.b16 %v1367
        %v1496 = vunpack.c.l.b16 %v1368
        %v1497 = vunpack.c.l.b16 %v1369
        %v1498 = vunpack.c.l.b16 %v1370
        %v1499 = vunpack.c.l.b16 %v1371
        %v1500 = vunpack.c.l.b16 %v1372
        %v1501 = vunpack.c.l.b16 %v1373
        %v1502 = vunpack.c.l.b16 %v1374
        %v1503 = vpack.c.b16 %v1440, %v1439
        %v1504 = vpack.c.b16 %v1442, %v1441
        %v1505 = vpack.c.b16 %v1444, %v1443
        %v1506 = vpack.c.b16 %v1446, %v1445
        %v1507 = vpack.c.b16 %v1448, %v1447
        %v1508 = vpack.c.b16 %v1450, %v1449
        %v1509 = vpack.c.b16 %v1452, %v1451
        %v1510 = vpack.c.b16 %v1454, %v1453
        %v1511 = vpack.c.b16 %v1456, %v1455
        %v1512 = vpack.c.b16 %v1458, %v1457
        %v1513 = vpack.c.b16 %v1460, %v1459
        %v1514 = vpack.c.b16 %v1462, %v1461
        %v1515 = vpack.c.b16 %v1464, %v1463
        %v1516 = vpack.c.b16 %v1466, %v1465
        %v1517 = vpack.c.b16 %v1468, %v1467
        %v1518 = vpack.c.b16 %v1470, %v1469
        %v1519 = vpack.c.b16 %v1472, %v1471
        %v1520 = vpack.c.b16 %v1474, %v1473
        %v1521 = vpack.c.b16 %v1476, %v1475
        %v1522 = vpack.c.b16 %v1478, %v1477
        %v1523 = vpack.c.b16 %v1480, %v1479
        %v1524 = vpack.c.b16 %v1482, %v1481
        %v1525 = vpack.c.b16 %v1484, %v1483
        %v1526 = vpack.c.b16 %v1486, %v1485
        %v1527 = vpack.c.b16 %v1488, %v1487
        %v1528 = vpack.c.b16 %v1490, %v1489
        %v1529 = vpack.c.b16 %v1492, %v1491
        %v1530 = vpack.c.b16 %v1494, %v1493
        %v1531 = vpack.c.b16 %v1496, %v1495
        %v1532 = vpack.c.b16 %v1498, %v1497
        %v1533 = vpack.c.b16 %v1500, %v1499
        %v1534 = vpack.c.b16 %v1502, %v1501
        %1567 = vmatprep.subr.bf16.mxu0 0
        %1568 = vmatpush1.bf16.msra.mxu0 %v1503
        %1569 = vmatprep.subr.bf16.mxu0 0
        %1570 = vmatpush1.bf16.msra.mxu0 %v1504
        %1571 = vmatprep.subr.bf16.mxu0 0
        %1572 = vmatpush1.bf16.msra.mxu0 %v1505
        %1573 = vmatprep.subr.bf16.mxu0 0
        %1574 = vmatpush1.bf16.msra.mxu0 %v1506
        %1575 = vmatprep.subr.bf16.mxu0 0
        %1576 = vmatpush1.bf16.msra.mxu0 %v1507
        %1577 = vmatprep.subr.bf16.mxu0 0
        %1578 = vmatpush1.bf16.msra.mxu0 %v1508
        %1579 = vmatprep.subr.bf16.mxu0 0
        %1580 = vmatpush1.bf16.msra.mxu0 %v1509
        %1581 = vmatprep.subr.bf16.mxu0 0
        %1582 = vmatpush1.bf16.msra.mxu0 %v1510
        %1583 = vmatprep.subr.bf16.mxu0 0
        %1584 = vmatpush1.bf16.msra.mxu0 %v1511
        %1585 = vmatprep.subr.bf16.mxu0 0
        %1586 = vmatpush1.bf16.msra.mxu0 %v1512
        %1587 = vmatprep.subr.bf16.mxu0 0
        %1588 = vmatpush1.bf16.msra.mxu0 %v1513
        %1589 = vmatprep.subr.bf16.mxu0 0
        %1590 = vmatpush1.bf16.msra.mxu0 %v1514
        %1591 = vmatprep.subr.bf16.mxu0 0
        %1592 = vmatpush1.bf16.msra.mxu0 %v1515
        %1593 = vmatprep.subr.bf16.mxu0 0
        %1594 = vmatpush1.bf16.msra.mxu0 %v1516
        %1595 = vmatprep.subr.bf16.mxu0 0
        %1596 = vmatpush1.bf16.msra.mxu0 %v1517
        %1597 = vmatprep.subr.bf16.mxu0 0
        %1598 = vmatpush1.bf16.msra.mxu0 %v1518
        %1599 = vmatprep.mubr.bf16.mxu0 %v1280
        %1600 = vmatmul.mubr.bf16.gmra.mrb[0].mxu0 %v1279
        %v1601 = vpop.f32.mrb[0].mxu0
        %v1602 = vadd.f32 0.0, %v1601
        %v1603 = vpop.f32.mrb[0].mxu0
        %v1604 = vpop.f32.mrb[0].mxu0
        %v1605 = vadd.f32 0.0, %v1604
        %v1606 = vpop.f32.mrb[0].mxu0
        %1607 = vmatprep.mubr.bf16.mxu0 %v1284
        %1608 = vmatmul.mubr.bf16.gmra.mrb[0].mxu0 %v1283
        %v1609 = vpop.f32.mrb[0].mxu0
        %v1610 = vadd.f32 0.0, %v1609
        %v1611 = vpop.f32.mrb[0].mxu0
        %v1612 = vpop.f32.mrb[0].mxu0
        %v1613 = vadd.f32 0.0, %v1612
        %v1614 = vpop.f32.mrb[0].mxu0
        %1615 = vmatprep.mubr.bf16.mxu0 %v1288
        %1616 = vmatmul.mubr.bf16.gmra.mrb[0].mxu0 %v1287
        %v1617 = vpop.f32.mrb[0].mxu0
        %v1618 = vadd.f32 0.0, %v1617
        %v1619 = vpop.f32.mrb[0].mxu0
        %v1620 = vpop.f32.mrb[0].mxu0
        %v1621 = vadd.f32 0.0, %v1620
        %v1622 = vpop.f32.mrb[0].mxu0
        %1623 = vmatprep.mubr.bf16.mxu0 %v1292
        %1624 = vmatmul.mubr.bf16.gmra.mrb[0].mxu0 %v1291
        %v1625 = vpop.f32.mrb[0].mxu0
        %v1626 = vadd.f32 0.0, %v1625
        %v1627 = vpop.f32.mrb[0].mxu0
        %v1628 = vpop.f32.mrb[0].mxu0
        %v1629 = vadd.f32 0.0, %v1628
        %v1630 = vpop.f32.mrb[0].mxu0
        %1631 = vmatprep.mubr.bf16.mxu0 %v1296
        %1632 = vmatmul.mubr.bf16.gmra.mrb[0].mxu0 %v1295
        %v1633 = vpop.f32.mrb[0].mxu0
        %v1634 = vadd.f32 0.0, %v1633
        %v1635 = vpop.f32.mrb[0].mxu0
        %v1636 = vpop.f32.mrb[0].mxu0
        %v1637 = vadd.f32 0.0, %v1636
        %v1638 = vpop.f32.mrb[0].mxu0
        %1639 = vmatprep.mubr.bf16.mxu0 %v1300
        %1640 = vmatmul.mubr.bf16.gmra.mrb[0].mxu0 %v1299
        %v1641 = vpop.f32.mrb[0].mxu0
        %v1642 = vadd.f32 0.0, %v1641
        %v1643 = vpop.f32.mrb[0].mxu0
        %v1644 = vpop.f32.mrb[0].mxu0
        %v1645 = vadd.f32 0.0, %v1644
        %v1646 = vpop.f32.mrb[0].mxu0
        %1647 = vmatprep.mubr.bf16.mxu0 %v1304
        %1648 = vmatmul.mubr.bf16.gmra.mrb[0].mxu0 %v1303
        %v1649 = vpop.f32.mrb[0].mxu0
        %v1650 = vadd.f32 0.0, %v1649
        %v1651 = vpop.f32.mrb[0].mxu0
        %v1652 = vpop.f32.mrb[0].mxu0
        %v1653 = vadd.f32 0.0, %v1652
        %v1654 = vpop.f32.mrb[0].mxu0
        %1655 = vmatprep.mubr.bf16.mxu0 %v1308
        %1656 = vmatmul.mubr.bf16.gmra.mrb[0].mxu0 %v1307
        %v1657 = vpop.f32.mrb[0].mxu0
        %v1658 = vadd.f32 0.0, %v1657
        %v1659 = vpop.f32.mrb[0].mxu0
        %v1660 = vpop.f32.mrb[0].mxu0
        %v1661 = vadd.f32 0.0, %v1660
        %v1662 = vpop.f32.mrb[0].mxu0
        %1663 = vdwg.mxu0
        %1664 = vmatprep.subr.bf16.mxu0 0
        %1665 = vmatpush1.bf16.msra.mxu0 %v1519
        %1666 = vmatprep.subr.bf16.mxu0 0
        %1667 = vmatpush1.bf16.msra.mxu0 %v1520
        %1668 = vmatprep.subr.bf16.mxu0 0
        %1669 = vmatpush1.bf16.msra.mxu0 %v1521
        %1670 = vmatprep.subr.bf16.mxu0 0
        %1671 = vmatpush1.bf16.msra.mxu0 %v1522
        %1672 = vmatprep.subr.bf16.mxu0 0
        %1673 = vmatpush1.bf16.msra.mxu0 %v1523
        %1674 = vmatprep.subr.bf16.mxu0 0
        %1675 = vmatpush1.bf16.msra.mxu0 %v1524
        %1676 = vmatprep.subr.bf16.mxu0 0
        %1677 = vmatpush1.bf16.msra.mxu0 %v1525
        %1678 = vmatprep.subr.bf16.mxu0 0
        %1679 = vmatpush1.bf16.msra.mxu0 %v1526
        %1680 = vmatprep.subr.bf16.mxu0 0
        %1681 = vmatpush1.bf16.msra.mxu0 %v1527
        %1682 = vmatprep.subr.bf16.mxu0 0
        %1683 = vmatpush1.bf16.msra.mxu0 %v1528
        %1684 = vmatprep.subr.bf16.mxu0 0
        %1685 = vmatpush1.bf16.msra.mxu0 %v1529
        %1686 = vmatprep.subr.bf16.mxu0 0
        %1687 = vmatpush1.bf16.msra.mxu0 %v1530
        %1688 = vmatprep.subr.bf16.mxu0 0
        %1689 = vmatpush1.bf16.msra.mxu0 %v1531
        %1690 = vmatprep.subr.bf16.mxu0 0
        %1691 = vmatpush1.bf16.msra.mxu0 %v1532
        %1692 = vmatprep.subr.bf16.mxu0 0
        %1693 = vmatpush1.bf16.msra.mxu0 %v1533
        %1694 = vmatprep.subr.bf16.mxu0 0
        %1695 = vmatpush1.bf16.msra.mxu0 %v1534
        %1696 = vmatprep.mubr.bf16.mxu0 %v1282
        %1697 = vmatmul.mubr.bf16.gmra.mrb[0].mxu0 %v1281
        %v1698 = vpop.f32.mrb[0].mxu0
        %v1699 = vadd.f32 %v1602, %v1698
        %v1700 = vpop.f32.mrb[0].mxu0
        %v1701 = vpop.f32.mrb[0].mxu0
        %v1702 = vadd.f32 %v1605, %v1701
        %v1703 = vpop.f32.mrb[0].mxu0
        %1704 = vmatprep.mubr.bf16.mxu0 %v1286
        %1705 = vmatmul.mubr.bf16.gmra.mrb[0].mxu0 %v1285
        %v1706 = vpop.f32.mrb[0].mxu0
        %v1707 = vadd.f32 %v1610, %v1706
        %v1708 = vpop.f32.mrb[0].mxu0
        %v1709 = vpop.f32.mrb[0].mxu0
        %v1710 = vadd.f32 %v1613, %v1709
        %v1711 = vpop.f32.mrb[0].mxu0
        %1712 = vmatprep.mubr.bf16.mxu0 %v1290
        %1713 = vmatmul.mubr.bf16.gmra.mrb[0].mxu0 %v1289
        %v1714 = vpop.f32.mrb[0].mxu0
        %v1715 = vadd.f32 %v1618, %v1714
        %v1716 = vpop.f32.mrb[0].mxu0
        %v1717 = vpop.f32.mrb[0].mxu0
        %v1718 = vadd.f32 %v1621, %v1717
        %v1719 = vpop.f32.mrb[0].mxu0
        %1720 = vmatprep.mubr.bf16.mxu0 %v1294
        %1721 = vmatmul.mubr.bf16.gmra.mrb[0].mxu0 %v1293
        %v1722 = vpop.f32.mrb[0].mxu0
        %v1723 = vadd.f32 %v1626, %v1722
        %v1724 = vpop.f32.mrb[0].mxu0
        %v1725 = vpop.f32.mrb[0].mxu0
        %v1726 = vadd.f32 %v1629, %v1725
        %v1727 = vpop.f32.mrb[0].mxu0
        %1728 = vmatprep.mubr.bf16.mxu0 %v1298
        %1729 = vmatmul.mubr.bf16.gmra.mrb[0].mxu0 %v1297
        %v1730 = vpop.f32.mrb[0].mxu0
        %v1731 = vadd.f32 %v1634, %v1730
        %v1732 = vpop.f32.mrb[0].mxu0
        %v1733 = vpop.f32.mrb[0].mxu0
        %v1734 = vadd.f32 %v1637, %v1733
        %v1735 = vpop.f32.mrb[0].mxu0
        %1736 = vmatprep.mubr.bf16.mxu0 %v1302
        %1737 = vmatmul.mubr.bf16.gmra.mrb[0].mxu0 %v1301
        %v1738 = vpop.f32.mrb[0].mxu0
        %v1739 = vadd.f32 %v1642, %v1738
        %v1740 = vpop.f32.mrb[0].mxu0
        %v1741 = vpop.f32.mrb[0].mxu0
        %v1742 = vadd.f32 %v1645, %v1741
        %v1743 = vpop.f32.mrb[0].mxu0
        %1744 = vmatprep.mubr.bf16.mxu0 %v1306
        %1745 = vmatmul.mubr.bf16.gmra.mrb[0].mxu0 %v1305
        %v1746 = vpop.f32.mrb[0].mxu0
        %v1747 = vadd.f32 %v1650, %v1746
        %v1748 = vpop.f32.mrb[0].mxu0
        %v1749 = vpop.f32.mrb[0].mxu0
        %v1750 = vadd.f32 %v1653, %v1749
        %v1751 = vpop.f32.mrb[0].mxu0
        %1752 = vmatprep.mubr.bf16.mxu0 %v1310
        %1753 = vmatmul.mubr.bf16.gmra.mrb[0].mxu0 %v1309
        %v1754 = vpop.f32.mrb[0].mxu0
        %v1755 = vadd.f32 %v1658, %v1754
        %v1756 = vpop.f32.mrb[0].mxu0
        %v1757 = vpop.f32.mrb[0].mxu0
        %v1758 = vadd.f32 %v1661, %v1757
        %v1759 = vpop.f32.mrb[0].mxu0
        %1760 = vdwg.mxu0
        %1761 = vst [vmem:[%s263] sm:$0xff] %v1699
        %1762 = vst [vmem:[%s263 + $0x8] sm:$0xff] %v1702
        %1763 = vst [vmem:[%s263 + $0x10] sm:$0xff] %v1707
        %1764 = vst [vmem:[%s263 + $0x18] sm:$0xff] %v1710
        %1765 = vst [vmem:[%s263 + $0x20] sm:$0xff] %v1715
        %1766 = vst [vmem:[%s263 + $0x28] sm:$0xff] %v1718
        %1767 = vst [vmem:[%s263 + $0x30] sm:$0xff] %v1723
        %1768 = vst [vmem:[%s263 + $0x38] sm:$0xff] %v1726
        %1769 = vst [vmem:[%s263 + $0x40] sm:$0xff] %v1731
        %1770 = vst [vmem:[%s263 + $0x48] sm:$0xff] %v1734
        %1771 = vst [vmem:[%s263 + $0x50] sm:$0xff] %v1739
        %1772 = vst [vmem:[%s263 + $0x58] sm:$0xff] %v1742
        %1773 = vst [vmem:[%s263 + $0x60] sm:$0xff] %v1747
        %1774 = vst [vmem:[%s263 + $0x68] sm:$0xff] %v1750
        %1775 = vst [vmem:[%s263 + $0x70] sm:$0xff] %v1755
        %1776 = vst [vmem:[%s263 + $0x78] sm:$0xff] %v1758
        %s1777 = sand.u32 %s128, 1
        %s1778 = scalar_lea.sflag [#allocation4], %s1777
        %s1779 = sand.u32 %s128, 1
        %s1780 = smul.addr %s1779, 128
        %s1781 = scalar_lea.vmem [#allocation5], %s1780
        %s1782 = sand.u32 %s154, 1
        %s1783 = scalar_lea.sflag [#allocation7], %s1782
        %s1784 = sand.u32 %s154, 1
        %s1785 = smul.addr %s1784, 512
        %s1786 = scalar_lea.vmem [#allocation6], %s1785
        // Predicated region
        $region41: #{tpu_custom_call.1} parent=35 // pred_check
          %p1787 = pneg %p138
        $region42: #{tpu_custom_call.1} parent=35 // pred_check_branch
          %1789 = sbr.rel (%p1787) target = $region44
        $region43: #{tpu_custom_call.1} parent=35 // pred_region
          %s1790 = smul.u32 16, %s26
          %s1792 = ssub.s32 2048, 2048
          %1793 = vsyncadd %s1778, %s1792
          %s1794 = smul.addr %s1790, 128
          %s1795 = scalar_lea.hbm %s4, %s1794
          %s1796 = sshll.u32 %s1781, 4
          %s1797 = int_to_ptr.vmem [resolvable:$true] %s1796
          %1802 = dma.vmem_to_hbm [thread:$0]  %s1797, 2048, %s1795, %s1778, 128, 128, 8
        $region44: #{tpu_custom_call.1} parent=35 // pred_fallthru
          _
        // Predicated region
        $region45: #{tpu_custom_call.1} parent=35 // pred_check
          %p1803 = pneg %p164
        $region46: #{tpu_custom_call.1} parent=35 // pred_check_branch
          %1805 = sbr.rel (%p1803) target = $region48
        $region47: #{tpu_custom_call.1} parent=35 // pred_region
          %s1806 = smul.u32 16, %s26
          %s1808 = ssub.s32 8192, 8192
          %1809 = vsyncadd %s1783, %s1808
          %s1810 = smul.addr %s1806, 4
          %s1811 = smul.addr %s1810, 128
          %s1812 = scalar_lea.hbm %s5, %s1811
          %s1813 = sshll.u32 %s1786, 4
          %s1814 = int_to_ptr.vmem [resolvable:$true] %s1813
          %1819 = dma.vmem_to_hbm [thread:$0]  %s1814, 8192, %s1812, %s1783, 512, 512, 32
        $region48: #{tpu_custom_call.1} parent=35 // pred_fallthru
          _
      $region36: #{tpu_custom_call.1} parent=5 // pred_fallthru
        _
      %p1820 = scmp.le.s32.totalorder 2, %s21
      // Predicated region
      $region49: #{tpu_custom_call.1} parent=5 // pred_check
        %p1821 = pneg %p1820
      $region50: #{tpu_custom_call.1} parent=5 // pred_check_branch
        %1823 = sbr.rel (%p1821) target = $region52
      $region51: #{tpu_custom_call.1} parent=5 // pred_region
        %s1824 = ssub.s32 %s21, 2
        // Predicated region
        $region53: #{tpu_custom_call.1} parent=51 // pred_check
          %p1825 = pneg %p144
        $region54: #{tpu_custom_call.1} parent=51 // pred_check_branch
          %1827 = sbr.rel (%p1825) target = $region56
        $region55: #{tpu_custom_call.1} parent=51 // pred_region
          %s1828 = sand.u32 %s129, 1
          %s1829 = scalar_lea.sflag [#allocation4], %s1828
          %s1830 = sand.u32 %s129, 1
          %s1831 = smul.addr %s1830, 128
          %s1832 = scalar_lea.vmem [#allocation5], %s1831
          %1833 = dma.done %s1829, 2048
        $region56: #{tpu_custom_call.1} parent=51 // pred_fallthru
          _
        // Predicated region
        $region57: #{tpu_custom_call.1} parent=51 // pred_check
          %p1834 = pneg %p170
        $region58: #{tpu_custom_call.1} parent=51 // pred_check_branch
          %1836 = sbr.rel (%p1834) target = $region60
        $region59: #{tpu_custom_call.1} parent=51 // pred_region
          %s1837 = sand.u32 %s155, 1
          %s1838 = scalar_lea.sflag [#allocation7], %s1837
          %s1839 = sand.u32 %s155, 1
          %s1840 = smul.addr %s1839, 512
          %s1841 = scalar_lea.vmem [#allocation6], %s1840
          %1842 = dma.done %s1838, 8192
        $region60: #{tpu_custom_call.1} parent=51 // pred_fallthru
          _
      $region52: #{tpu_custom_call.1} parent=5 // pred_fallthru
        _
    $region6: #{tpu_custom_call.1} parent=1 // loop_footer
      %s25 = sadd.s32 1, %s21
    $region7: #{tpu_custom_call.1} parent=1 // loop_footer_branch
      %20 = sbr.rel target = $region3
    $region8: #{tpu_custom_call.1} parent=1 // loop_exit
      _
    %1843 = vsyncpa [#allocation3], 1
    %s1844 = scalar_lea.sflag [#allocation3], 1
    %1845 = vsyncpa %s1844, 1
    %1846 = vsyncpa [#allocation4], 1
    %s1847 = scalar_lea.sflag [#allocation4], 1
    %1848 = vsyncpa %s1847, 1
    %1849 = vsyncpa [#allocation7], 1
    %s1850 = scalar_lea.sflag [#allocation7], 1
    %1851 = vsyncpa %s1850, 1

</llo_original>
